<compile_context>
chip_gen: v6e
topology: v6e:2x2x1
jax: 0.10.0
libtpu: 0.0.40
codegen_flags: <defaults>
</compile_context>

<pallas_src>
import functools

import jax
import jax.numpy as jnp
from jax.experimental import pallas as pl
from jax.experimental.pallas import tpu as pltpu

LANE = 128  # lane width used to pad the cas/actionness output slab


def _actionness_kernel(x_ref, hp_ref, hn_ref, wr_ref, br_ref, wf_ref, bf_ref,
                       wc_ref, emb_ref, slab_ref, *, t_tile, halo_rows, d_in,
                       n_cls):
    """Grid = (batch, time-tile).

    x_ref    : (1, TT, 2D)   f32   current time tile of (rgb | flow)
    hp_ref   : (1, HB, 2D)   f32   halo block ending right before this tile
    hn_ref   : (1, HB, 2D)   f32   halo block starting right after this tile
    wr_ref   : (3, D, E)     bf16  rgb conv3 weight (tap index leading)
    br_ref   : (1, E)        f32   rgb conv3 bias
    wf_ref   : (3, D, E)     bf16  flow conv3 weight
    bf_ref   : (1, E)        f32   flow conv3 bias
    wc_ref   : (E, 128)      bf16  1x1 classifier weight, zero-padded to 128 lanes
    emb_ref  : (1, TT, E)    f32   embeddings tile
    slab_ref : (1, TT, 128)  f32   lane-dense output: [:, :C] = cas, [:, C] = actionness
    """
    t = pl.program_id(1)
    is_first = t == 0
    is_last = t == pl.num_programs(1) - 1

    x_cur = x_ref[0]                                     # (TT, 2D) f32
    prev_row = hp_ref[0][halo_rows - 1:halo_rows, :]     # (1, 2D) = x[t0-1]
    next_row = hn_ref[0][0:1, :]                         # (1, 2D) = x[t0+TT]

    # Zero-padding of the k=3 conv only matters at the sequence edges; this
    # touches just the (1, 2D) halo rows, so interior tiles pay ~nothing.
    zero_row = jnp.zeros_like(prev_row)
    prev_row = jnp.where(is_first, zero_row, prev_row)
    next_row = jnp.where(is_last, zero_row, next_row)

    # Tile-local shifted views: roll within the tile (XLU) and drop the halo
    # row into the wrapped position (VALU select).  All O(TT * 2D).
    row = jax.lax.broadcasted_iota(jnp.int32, (t_tile, 1), 0)
    x_prev = jnp.where(row == 0, prev_row, pltpu.roll(x_cur, shift=1, axis=0))
    x_next = jnp.where(row == t_tile - 1, next_row,
                       pltpu.roll(x_cur, shift=t_tile - 1, axis=0))

    # Cast to bf16 only right before the MXU (keeps roll/select native f32,
    # which matters on v5e where the VPU has no bf16 datapath).
    xp = x_prev.astype(jnp.bfloat16)
    xc = x_cur.astype(jnp.bfloat16)
    xn = x_next.astype(jnp.bfloat16)

    d = d_in
    f32 = jnp.float32
    # Three accumulating matmuls per stream (no concat materialization).
    y_rgb = (jnp.dot(xp[:, :d], wr_ref[0], preferred_element_type=f32)
             + jnp.dot(xc[:, :d], wr_ref[1], preferred_element_type=f32)
             + jnp.dot(xn[:, :d], wr_ref[2], preferred_element_type=f32))
    y_flow = (jnp.dot(xp[:, d:], wf_ref[0], preferred_element_type=f32)
              + jnp.dot(xc[:, d:], wf_ref[1], preferred_element_type=f32)
              + jnp.dot(xn[:, d:], wf_ref[2], preferred_element_type=f32))

    # f32 epilogue (bias + ReLU + add) -> f_embed_rgb / f_embed_flow / embeddings.
    out = (jnp.maximum(y_rgb + br_ref[...], 0.0)
           + jnp.maximum(y_flow + bf_ref[...], 0.0))             # (TT, E) f32
    emb_ref[0] = out.astype(emb_ref.dtype)

    # Dropout(p=0.7) is identity at inference time.
    # f_cls: 1x1 conv (no bias) + ReLU.  wc is zero-padded to 128 output lanes,
    # so lanes >= n_cls are exactly 0 and the full-lane sum equals the class sum.
    cas = jnp.maximum(
        jnp.dot(out.astype(jnp.bfloat16), wc_ref[...],
                preferred_element_type=f32), 0.0)                # (TT, 128)
    act = jnp.sum(cas, axis=-1, keepdims=True)                   # actionness
    lane = jax.lax.broadcasted_iota(jnp.int32, cas.shape, 1)
    slab_ref[0] = jnp.where(lane == n_cls, act, cas).astype(slab_ref.dtype)


def prepare_params(params):
    """One-time repack of the module weights for the kernel (not per-call work).

    NOTE: real PyTorch Conv1d weights are (out_ch, in_ch, k); transpose to
    (k, in_ch, out_ch) before calling this.
    """
    w_rgb, w_flow, w_cls = params["w_rgb"], params["w_flow"], params["w_cls"]
    k, d, e = w_rgb.shape
    c = w_cls.shape[1]
    assert k == 3 and c < LANE
    w_cls_pad = jnp.zeros((e, LANE), jnp.float32).at[:, :c].set(w_cls)
    return {
        "w_rgb": w_rgb.astype(jnp.bfloat16),                      # (3, D, E)
        "w_flow": w_flow.astype(jnp.bfloat16),                    # (3, D, E)
        "b_rgb": params["b_rgb"].astype(jnp.float32),              # (1, E)
        "b_flow": params["b_flow"].astype(jnp.float32),            # (1, E)
        "w_cls": w_cls_pad.astype(jnp.bfloat16),                   # (E, 128)
    }


def actionness_module(x, prepped, num_classes):
    """x: (B, T, 2*len_feature) f32.  Returns (embeddings, cas, actionness)."""
    B, T, D2 = x.shape
    K, D, E = prepped["w_rgb"].shape
    assert K == 3 and D2 == 2 * D
    C = num_classes

    # Generation-aware VMEM capacity (v5e/v6e: 128 MiB, v7x: 64 MiB per core).
    try:
        cap = getattr(pltpu.get_tpu_info(), "vmem_capacity_bytes", None)
    except Exception:  # pragma: no cover - defensive, keeps CPU interpret working
        cap = None
    if not cap:
        cap = 64 * 2 ** 20

    # Time tile: multiples of 16 only (bf16 sublane packing).  t_tile=256 only
    # when VMEM is roomy (v5e/v6e).  Fallback: whole sequence in one tile.
    cands = (256, 128, 64, 32, 16) if cap >= 96 * 2 ** 20 else (128, 64, 32, 16)
    t_tile = T
    for cand in cands:
        if T % cand == 0:
            t_tile = cand
            break
    n_tt = T // t_tile
    hb = 8 if n_tt > 1 else t_tile       # halo block rows (sublane aligned)
    nb = t_tile // hb                    # halo blocks per time tile
    tot_hb = pl.cdiv(T, hb)

    kernel = functools.partial(_actionness_kernel, t_tile=t_tile, halo_rows=hb,
                               d_in=D, n_cls=C)

    # Constant-index weight/bias blocks: single-buffer (no gain from 2x buffers).
    const = dict(pipeline_mode=pl.Buffered(1))

    grid_spec = pltpu.PrefetchScalarGridSpec(
        num_scalar_prefetch=0,
        grid=(B, n_tt),
        in_specs=[
            pl.BlockSpec((1, t_tile, 2 * D), lambda b, t: (b, t, 0)),        # x tile
            pl.BlockSpec((1, hb, 2 * D),                                     # prev halo
                         lambda b, t: (b, jnp.maximum(t * nb - 1, 0), 0)),
            pl.BlockSpec((1, hb, 2 * D),                                     # next halo
                         lambda b, t: (b, jnp.minimum((t + 1) * nb, tot_hb - 1), 0)),
            pl.BlockSpec((3, D, E), lambda b, t: (0, 0, 0), **const),        # w_rgb
            pl.BlockSpec((1, E), lambda b, t: (0, 0), **const),              # b_rgb
            pl.BlockSpec((3, D, E), lambda b, t: (0, 0, 0), **const),        # w_flow
            pl.BlockSpec((1, E), lambda b, t: (0, 0), **const),              # b_flow
            pl.BlockSpec((E, LANE), lambda b, t: (0, 0), **const),           # w_cls
        ],
        out_specs=[
            pl.BlockSpec((1, t_tile, E), lambda b, t: (b, t, 0)),            # embeddings
            pl.BlockSpec((1, t_tile, LANE), lambda b, t: (b, t, 0)),         # cas|act slab
        ],
    )

    # VMEM budget from the actual (T-independent) footprint, with ~20% headroom
    # below physical capacity for compiler-internal scratch.
    bf16, f32b = 2, 4
    x_blk = t_tile * 2 * D * f32b
    halo_blk = hb * 2 * D * f32b
    w_res = 2 * 3 * D * E * bf16 + 2 * E * f32b + E * LANE * bf16
    out_blk = t_tile * E * f32b + t_tile * LANE * f32b
    temps = (2 * t_tile * 2 * D * f32b      # x_prev / x_next (f32)
             + 3 * t_tile * 2 * D * bf16    # bf16 tap casts
             + 3 * t_tile * E * f32b        # y_rgb / y_flow / out
             + 2 * t_tile * LANE * f32b)    # cas / slab temporary
    footprint = 2 * (x_blk + 2 * halo_blk) + w_res + 2 * out_blk + temps
    vmem_limit = int(min(max(2 * footprint, 32 * 2 ** 20), int(0.8 * cap)))

    # Grid: both axes "parallel" (megacore / dual-TC sharding).  On v7x make
    # sure B * n_tt is even for full dual-core utilization (true at production
    # shapes; the time axis provides the parallelism when B is small/odd).
    emb, slab = pl.pallas_call(
        kernel,
        out_shape=(
            jax.ShapeDtypeStruct((B, T, E), jnp.float32),      # embeddings
            jax.ShapeDtypeStruct((B, T, LANE), jnp.float32),   # cas|actionness slab
        ),
        grid_spec=grid_spec,
        compiler_params=pltpu.CompilerParams(
            dimension_semantics=("parallel", "parallel"),
            vmem_limit_bytes=vmem_limit),
    )(x, x, x, prepped["w_rgb"], prepped["b_rgb"], prepped["w_flow"],
      prepped["b_flow"], prepped["w_cls"])

    cas = slab[:, :, :C]
    actionness = slab[:, :, C]
    return emb, cas, actionness


def _reference(x, params):
    """Pure-JAX f32 reference of the PyTorch forward."""
    D = params["w_rgb"].shape[1]
    T = x.shape[1]

    def conv3_relu(inp, w, b):
        pad = jnp.pad(inp, ((0, 0), (1, 1), (0, 0)))
        y = sum(jnp.einsum("btd,de->bte", pad[:, k:k + T], w[k]) for k in range(3))
        return jax.nn.relu(y + b)

    out = (conv3_relu(x[:, :, :D], params["w_rgb"], params["b_rgb"]) +
           conv3_relu(x[:, :, D:2 * D], params["w_flow"], params["b_flow"]))
    cas = jax.nn.relu(jnp.einsum("bte,ec->btc", out, params["w_cls"]))
    return out, cas, cas.sum(axis=2)


def init_params(key, len_feature, embed_dim, num_classes):
    """Deterministic init mimicking PyTorch Conv1d default (uniform +/- 1/sqrt(fan_in*k))."""
    k1, k2, k3, k4, k5 = jax.random.split(key, 5)
    bound3 = 1.0 / jnp.sqrt(jnp.float32(len_feature * 3))
    bound1 = 1.0 / jnp.sqrt(jnp.float32(embed_dim * 1))
    return {
        "w_rgb": jax.random.uniform(k1, (3, len_feature, embed_dim), jnp.float32,
                                    -bound3, bound3),
        "b_rgb": jax.random.uniform(k2, (1, embed_dim), jnp.float32, -bound3, bound3),
        "w_flow": jax.random.uniform(k3, (3, len_feature, embed_dim), jnp.float32,
                                     -bound3, bound3),
        "b_flow": jax.random.uniform(k4, (1, embed_dim), jnp.float32, -bound3, bound3),
        "w_cls": jax.random.uniform(k5, (embed_dim, num_classes), jnp.float32,
                                    -bound1, bound1),
    }


if __name__ == "__main__":
    # Small shapes consistent with the module: x is (B, T, 2*len_feature).
    B, T = 2, 16
    LEN_FEATURE = 128     # 1024 in the original module
    EMBED_DIM = 256       # 2048 in the original module
    NUM_CLASSES = 8

    key = jax.random.PRNGKey(0)
    k_x, k_p = jax.random.split(key)
    x = jax.random.normal(k_x, (B, T, 2 * LEN_FEATURE), jnp.float32)
    params = init_params(k_p, LEN_FEATURE, EMBED_DIM, NUM_CLASSES)
    prepped = prepare_params(params)

    emb, cas, actionness = jax.block_until_ready(
        actionness_module(x, prepped, NUM_CLASSES))

    # Sanity check against a pure-JAX f32 reference (kernel uses bf16 MXU inputs
    # with f32 accumulation, so tolerances are slightly loosened).
    emb_ref, cas_ref, act_ref = _reference(x, params)
    assert emb.shape == (B, T, EMBED_DIM)
    assert cas.shape == (B, T, NUM_CLASSES)
    assert actionness.shape == (B, T)
    assert jnp.allclose(emb, emb_ref, atol=5e-2, rtol=5e-2)
    assert jnp.allclose(cas, cas_ref, atol=5e-2, rtol=5e-2)
    assert jnp.allclose(actionness, act_ref, atol=1e-1, rtol=5e-2)

    print("KERNEL_OK")
</pallas_src>

<mosaic_0001>
module attributes {stable_mosaic.version = 11 : i64} {
  func.func @_actionness_kernel(%arg0: i32, %arg1: i32, %arg2: memref<1x16x256xf32, #tpu.memory_space<vmem>>, %arg3: memref<1x16x256xf32, #tpu.memory_space<vmem>>, %arg4: memref<1x16x256xf32, #tpu.memory_space<vmem>>, %arg5: memref<3x128x256xbf16, #tpu.memory_space<vmem>>, %arg6: memref<1x256xf32, #tpu.memory_space<vmem>>, %arg7: memref<3x128x256xbf16, #tpu.memory_space<vmem>>, %arg8: memref<1x256xf32, #tpu.memory_space<vmem>>, %arg9: memref<256x128xbf16, #tpu.memory_space<vmem>>, %arg10: memref<1x16x256xf32, #tpu.memory_space<vmem>>, %arg11: memref<1x16x128xf32, #tpu.memory_space<vmem>>) attributes {dimension_semantics = [#tpu.dimension_semantics<parallel>, #tpu.dimension_semantics<parallel>], iteration_bounds = array<i64: 2, 1>, scalar_prefetch = 0 : i64, scratch_operands = 0 : i64, tpu.core_type = #tpu.core_type<tc>, window_params = [{transform_indices = @transform_0, window_bounds = array<i64: 1, 16, 256>}, {transform_indices = @transform_1, window_bounds = array<i64: 1, 16, 256>}, {transform_indices = @transform_2, window_bounds = array<i64: 1, 16, 256>}, {pipeline_mode = #tpu.pipeline_mode<synchronous>, transform_indices = @transform_3, window_bounds = array<i64: 3, 128, 256>}, {pipeline_mode = #tpu.pipeline_mode<synchronous>, transform_indices = @transform_4, window_bounds = array<i64: 1, 256>}, {pipeline_mode = #tpu.pipeline_mode<synchronous>, transform_indices = @transform_5, window_bounds = array<i64: 3, 128, 256>}, {pipeline_mode = #tpu.pipeline_mode<synchronous>, transform_indices = @transform_6, window_bounds = array<i64: 1, 256>}, {pipeline_mode = #tpu.pipeline_mode<synchronous>, transform_indices = @transform_7, window_bounds = array<i64: 256, 128>}, {transform_indices = @transform_8, window_bounds = array<i64: 1, 16, 256>}, {transform_indices = @transform_9, window_bounds = array<i64: 1, 16, 128>}]} {
    %c0_i32 = arith.constant 0 : i32
    %0 = arith.cmpi eq, %arg1, %c0_i32 : i32
    %c0_i32_0 = arith.constant 0 : i32
    %1 = arith.cmpi eq, %arg1, %c0_i32_0 : i32
    %c0 = arith.constant 0 : index
    %c0_1 = arith.constant 0 : index
    %c0_2 = arith.constant 0 : index
    %2 = vector.load %arg2[%c0, %c0_1, %c0_2] : memref<1x16x256xf32, #tpu.memory_space<vmem>>, vector<1x16x256xf32>
    %3 = vector.shape_cast %2 : vector<1x16x256xf32> to vector<16x256xf32>
    %c0_3 = arith.constant 0 : index
    %c0_4 = arith.constant 0 : index
    %c0_5 = arith.constant 0 : index
    %4 = vector.load %arg3[%c0_3, %c0_4, %c0_5] : memref<1x16x256xf32, #tpu.memory_space<vmem>>, vector<1x16x256xf32>
    %5 = vector.shape_cast %4 : vector<1x16x256xf32> to vector<16x256xf32>
    %6 = vector.extract_strided_slice %5 {offsets = [15, 0], sizes = [1, 256], strides = [1, 1]} : vector<16x256xf32> to vector<1x256xf32>
    %c0_6 = arith.constant 0 : index
    %c0_7 = arith.constant 0 : index
    %c0_8 = arith.constant 0 : index
    %7 = vector.load %arg4[%c0_6, %c0_7, %c0_8] : memref<1x16x256xf32, #tpu.memory_space<vmem>>, vector<1x16x256xf32>
    %8 = vector.shape_cast %7 : vector<1x16x256xf32> to vector<16x256xf32>
    %9 = vector.extract_strided_slice %8 {offsets = [0, 0], sizes = [1, 256], strides = [1, 1]} : vector<16x256xf32> to vector<1x256xf32>
    %cst = arith.constant 0.000000e+00 : f32
    %10 = vector.broadcast %cst : f32 to vector<1x256xf32>
    %11 = arith.select %0, %10, %6 : vector<1x256xf32>
    %12 = arith.select %1, %10, %9 : vector<1x256xf32>
    %13 = tpu.iota {dimensions = array<i32: 0>} : vector<16x1xi32>
    %c0_i32_9 = arith.constant 0 : i32
    %14 = vector.broadcast %c0_i32_9 : i32 to vector<16x1xi32>
    %15 = arith.cmpi eq, %13, %14 : vector<16x1xi32>
    %c1_i32 = arith.constant 1 : i32
    %16 = tpu.dynamic_rotate %3 by %c1_i32 dim 0 : vector<16x256xf32>, i32 -> vector<16x256xf32>
    %17 = vector.shape_cast %15 : vector<16x1xi1> to vector<16x1xi1>
    %18 = vector.broadcast %17 : vector<16x1xi1> to vector<16x256xi1>
    %19 = vector.shape_cast %11 : vector<1x256xf32> to vector<1x256xf32>
    %20 = vector.broadcast %19 : vector<1x256xf32> to vector<16x256xf32>
    %21 = arith.select %18, %20, %16 : vector<16x256xi1>, vector<16x256xf32>
    %c15_i32 = arith.constant 15 : i32
    %22 = vector.broadcast %c15_i32 : i32 to vector<16x1xi32>
    %23 = arith.cmpi eq, %13, %22 : vector<16x1xi32>
    %c15_i32_10 = arith.constant 15 : i32
    %24 = tpu.dynamic_rotate %3 by %c15_i32_10 dim 0 : vector<16x256xf32>, i32 -> vector<16x256xf32>
    %25 = vector.shape_cast %23 : vector<16x1xi1> to vector<16x1xi1>
    %26 = vector.broadcast %25 : vector<16x1xi1> to vector<16x256xi1>
    %27 = vector.shape_cast %12 : vector<1x256xf32> to vector<1x256xf32>
    %28 = vector.broadcast %27 : vector<1x256xf32> to vector<16x256xf32>
    %29 = arith.select %26, %28, %24 : vector<16x256xi1>, vector<16x256xf32>
    %30 = arith.truncf %21 : vector<16x256xf32> to vector<16x256xbf16>
    %31 = arith.truncf %3 : vector<16x256xf32> to vector<16x256xbf16>
    %32 = arith.truncf %29 : vector<16x256xf32> to vector<16x256xbf16>
    %33 = vector.extract_strided_slice %30 {offsets = [0, 0], sizes = [16, 128], strides = [1, 1]} : vector<16x256xbf16> to vector<16x128xbf16>
    %c0_11 = arith.constant 0 : index
    %c0_12 = arith.constant 0 : index
    %c0_13 = arith.constant 0 : index
    %34 = vector.load %arg5[%c0_11, %c0_12, %c0_13] : memref<3x128x256xbf16, #tpu.memory_space<vmem>>, vector<1x128x256xbf16>
    %35 = vector.shape_cast %34 : vector<1x128x256xbf16> to vector<128x256xbf16>
    %cst_14 = arith.constant dense<0.000000e+00> : vector<16x256xf32>
    %36 = tpu.matmul %33, %35, %cst_14 {dimension_numbers = #tpu.dot_dimension_numbers<[1], [0], [0], [1], [0, 0, 1, 1], [], []>} : vector<16x128xbf16>, vector<128x256xbf16>, vector<16x256xf32> -> vector<16x256xf32>
    %37 = vector.extract_strided_slice %31 {offsets = [0, 0], sizes = [16, 128], strides = [1, 1]} : vector<16x256xbf16> to vector<16x128xbf16>
    %c1 = arith.constant 1 : index
    %c0_15 = arith.constant 0 : index
    %c0_16 = arith.constant 0 : index
    %38 = vector.load %arg5[%c1, %c0_15, %c0_16] : memref<3x128x256xbf16, #tpu.memory_space<vmem>>, vector<1x128x256xbf16>
    %39 = vector.shape_cast %38 : vector<1x128x256xbf16> to vector<128x256xbf16>
    %cst_17 = arith.constant dense<0.000000e+00> : vector<16x256xf32>
    %40 = tpu.matmul %37, %39, %cst_17 {dimension_numbers = #tpu.dot_dimension_numbers<[1], [0], [0], [1], [0, 0, 1, 1], [], []>} : vector<16x128xbf16>, vector<128x256xbf16>, vector<16x256xf32> -> vector<16x256xf32>
    %41 = arith.addf %36, %40 : vector<16x256xf32>
    %42 = vector.extract_strided_slice %32 {offsets = [0, 0], sizes = [16, 128], strides = [1, 1]} : vector<16x256xbf16> to vector<16x128xbf16>
    %c2 = arith.constant 2 : index
    %c0_18 = arith.constant 0 : index
    %c0_19 = arith.constant 0 : index
    %43 = vector.load %arg5[%c2, %c0_18, %c0_19] : memref<3x128x256xbf16, #tpu.memory_space<vmem>>, vector<1x128x256xbf16>
    %44 = vector.shape_cast %43 : vector<1x128x256xbf16> to vector<128x256xbf16>
    %cst_20 = arith.constant dense<0.000000e+00> : vector<16x256xf32>
    %45 = tpu.matmul %42, %44, %cst_20 {dimension_numbers = #tpu.dot_dimension_numbers<[1], [0], [0], [1], [0, 0, 1, 1], [], []>} : vector<16x128xbf16>, vector<128x256xbf16>, vector<16x256xf32> -> vector<16x256xf32>
    %46 = arith.addf %41, %45 : vector<16x256xf32>
    %47 = vector.extract_strided_slice %30 {offsets = [0, 128], sizes = [16, 128], strides = [1, 1]} : vector<16x256xbf16> to vector<16x128xbf16>
    %c0_21 = arith.constant 0 : index
    %c0_22 = arith.constant 0 : index
    %c0_23 = arith.constant 0 : index
    %48 = vector.load %arg7[%c0_21, %c0_22, %c0_23] : memref<3x128x256xbf16, #tpu.memory_space<vmem>>, vector<1x128x256xbf16>
    %49 = vector.shape_cast %48 : vector<1x128x256xbf16> to vector<128x256xbf16>
    %cst_24 = arith.constant dense<0.000000e+00> : vector<16x256xf32>
    %50 = tpu.matmul %47, %49, %cst_24 {dimension_numbers = #tpu.dot_dimension_numbers<[1], [0], [0], [1], [0, 0, 1, 1], [], []>} : vector<16x128xbf16>, vector<128x256xbf16>, vector<16x256xf32> -> vector<16x256xf32>
    %51 = vector.extract_strided_slice %31 {offsets = [0, 128], sizes = [16, 128], strides = [1, 1]} : vector<16x256xbf16> to vector<16x128xbf16>
    %c1_25 = arith.constant 1 : index
    %c0_26 = arith.constant 0 : index
    %c0_27 = arith.constant 0 : index
    %52 = vector.load %arg7[%c1_25, %c0_26, %c0_27] : memref<3x128x256xbf16, #tpu.memory_space<vmem>>, vector<1x128x256xbf16>
    %53 = vector.shape_cast %52 : vector<1x128x256xbf16> to vector<128x256xbf16>
    %cst_28 = arith.constant dense<0.000000e+00> : vector<16x256xf32>
    %54 = tpu.matmul %51, %53, %cst_28 {dimension_numbers = #tpu.dot_dimension_numbers<[1], [0], [0], [1], [0, 0, 1, 1], [], []>} : vector<16x128xbf16>, vector<128x256xbf16>, vector<16x256xf32> -> vector<16x256xf32>
    %55 = arith.addf %50, %54 : vector<16x256xf32>
    %56 = vector.extract_strided_slice %32 {offsets = [0, 128], sizes = [16, 128], strides = [1, 1]} : vector<16x256xbf16> to vector<16x128xbf16>
    %c2_29 = arith.constant 2 : index
    %c0_30 = arith.constant 0 : index
    %c0_31 = arith.constant 0 : index
    %57 = vector.load %arg7[%c2_29, %c0_30, %c0_31] : memref<3x128x256xbf16, #tpu.memory_space<vmem>>, vector<1x128x256xbf16>
    %58 = vector.shape_cast %57 : vector<1x128x256xbf16> to vector<128x256xbf16>
    %cst_32 = arith.constant dense<0.000000e+00> : vector<16x256xf32>
    %59 = tpu.matmul %56, %58, %cst_32 {dimension_numbers = #tpu.dot_dimension_numbers<[1], [0], [0], [1], [0, 0, 1, 1], [], []>} : vector<16x128xbf16>, vector<128x256xbf16>, vector<16x256xf32> -> vector<16x256xf32>
    %60 = arith.addf %55, %59 : vector<16x256xf32>
    %c0_33 = arith.constant 0 : index
    %c0_34 = arith.constant 0 : index
    %61 = vector.load %arg6[%c0_33, %c0_34] : memref<1x256xf32, #tpu.memory_space<vmem>>, vector<1x256xf32>
    %62 = vector.broadcast %61 : vector<1x256xf32> to vector<16x256xf32>
    %63 = arith.addf %46, %62 : vector<16x256xf32>
    %cst_35 = arith.constant 0.000000e+00 : f32
    %64 = vector.broadcast %cst_35 : f32 to vector<16x256xf32>
    %65 = arith.maximumf %63, %64 : vector<16x256xf32>
    %c0_36 = arith.constant 0 : index
    %c0_37 = arith.constant 0 : index
    %66 = vector.load %arg8[%c0_36, %c0_37] : memref<1x256xf32, #tpu.memory_space<vmem>>, vector<1x256xf32>
    %67 = vector.broadcast %66 : vector<1x256xf32> to vector<16x256xf32>
    %68 = arith.addf %60, %67 : vector<16x256xf32>
    %cst_38 = arith.constant 0.000000e+00 : f32
    %69 = vector.broadcast %cst_38 : f32 to vector<16x256xf32>
    %70 = arith.maximumf %68, %69 : vector<16x256xf32>
    %71 = arith.addf %65, %70 : vector<16x256xf32>
    %c0_39 = arith.constant 0 : index
    %c0_40 = arith.constant 0 : index
    %c0_41 = arith.constant 0 : index
    %72 = vector.load %arg10[%c0_39, %c0_40, %c0_41] : memref<1x16x256xf32, #tpu.memory_space<vmem>>, vector<1x16x256xf32>
    %73 = vector.shape_cast %72 : vector<1x16x256xf32> to vector<16x256xf32>
    %74 = vector.shape_cast %71 : vector<16x256xf32> to vector<1x16x256xf32>
    tpu.vector_store %arg10[%c0_39, %c0_40, %c0_41], %74 {strides = array<i32>} : memref<1x16x256xf32, #tpu.memory_space<vmem>>, vector<1x16x256xf32>,
    %75 = arith.truncf %71 : vector<16x256xf32> to vector<16x256xbf16>
    %c0_42 = arith.constant 0 : index
    %c0_43 = arith.constant 0 : index
    %76 = vector.load %arg9[%c0_42, %c0_43] : memref<256x128xbf16, #tpu.memory_space<vmem>>, vector<256x128xbf16>
    %cst_44 = arith.constant dense<0.000000e+00> : vector<16x128xf32>
    %77 = tpu.matmul %75, %76, %cst_44 {dimension_numbers = #tpu.dot_dimension_numbers<[1], [0], [0], [1], [0, 0, 1, 1], [], []>} : vector<16x256xbf16>, vector<256x128xbf16>, vector<16x128xf32> -> vector<16x128xf32>
    %cst_45 = arith.constant 0.000000e+00 : f32
    %78 = vector.broadcast %cst_45 : f32 to vector<16x128xf32>
    %79 = arith.maximumf %77, %78 : vector<16x128xf32>
    %cst_46 = arith.constant dense<0.000000e+00> : vector<16xf32>
    %80 = vector.multi_reduction <add>, %79, %cst_46 [1] : vector<16x128xf32> to vector<16xf32>
    %81 = vector.shape_cast %80 : vector<16xf32> to vector<16x1xf32>
    %82 = tpu.iota {dimensions = array<i32: 1>} : vector<16x128xi32>
    %c8_i32 = arith.constant 8 : i32
    %83 = vector.broadcast %c8_i32 : i32 to vector<16x128xi32>
    %84 = arith.cmpi eq, %82, %83 : vector<16x128xi32>
    %85 = vector.shape_cast %81 : vector<16x1xf32> to vector<16x1xf32>
    %86 = vector.broadcast %85 : vector<16x1xf32> to vector<16x128xf32>
    %87 = arith.select %84, %86, %79 : vector<16x128xi1>, vector<16x128xf32>
    %c0_47 = arith.constant 0 : index
    %c0_48 = arith.constant 0 : index
    %c0_49 = arith.constant 0 : index
    %88 = vector.load %arg11[%c0_47, %c0_48, %c0_49] : memref<1x16x128xf32, #tpu.memory_space<vmem>>, vector<1x16x128xf32>
    %89 = vector.shape_cast %88 : vector<1x16x128xf32> to vector<16x128xf32>
    %90 = vector.shape_cast %87 : vector<16x128xf32> to vector<1x16x128xf32>
    tpu.vector_store %arg11[%c0_47, %c0_48, %c0_49], %90 {strides = array<i32>} : memref<1x16x128xf32, #tpu.memory_space<vmem>>, vector<1x16x128xf32>,
    return
  }
  func.func @transform_0(%arg0: i32, %arg1: i32) -> (i32, i32, i32) {
    %c0_i32 = arith.constant 0 : i32
    %c0_i32_0 = arith.constant 0 : i32
    return %arg0, %arg1, %c0_i32 : i32, i32, i32
  }
  func.func @transform_1(%arg0: i32, %arg1: i32) -> (i32, i32, i32) {
    %c1_i32 = arith.constant 1 : i32
    %0 = arith.muli %arg1, %c1_i32 : i32
    %c1_i32_0 = arith.constant 1 : i32
    %1 = arith.subi %0, %c1_i32_0 : i32
    %c0_i32 = arith.constant 0 : i32
    %2 = arith.maxsi %1, %c0_i32 : i32
    %c0_i32_1 = arith.constant 0 : i32
    %c0_i32_2 = arith.constant 0 : i32
    return %arg0, %2, %c0_i32_1 : i32, i32, i32
  }
  func.func @transform_2(%arg0: i32, %arg1: i32) -> (i32, i32, i32) {
    %c1_i32 = arith.constant 1 : i32
    %0 = arith.addi %arg1, %c1_i32 : i32
    %c1_i32_0 = arith.constant 1 : i32
    %1 = arith.muli %0, %c1_i32_0 : i32
    %c0_i32 = arith.constant 0 : i32
    %2 = arith.minsi %1, %c0_i32 : i32
    %c0_i32_1 = arith.constant 0 : i32
    %c0_i32_2 = arith.constant 0 : i32
    return %arg0, %2, %c0_i32_1 : i32, i32, i32
  }
  func.func @transform_3(%arg0: i32, %arg1: i32) -> (i32, i32, i32) {
    %c0_i32 = arith.constant 0 : i32
    %c0_i32_0 = arith.constant 0 : i32
    %c0_i32_1 = arith.constant 0 : i32
    %c0_i32_2 = arith.constant 0 : i32
    return %c0_i32, %c0_i32_0, %c0_i32_1 : i32, i32, i32
  }
  func.func @transform_4(%arg0: i32, %arg1: i32) -> (i32, i32) {
    %c0_i32 = arith.constant 0 : i32
    %c0_i32_0 = arith.constant 0 : i32
    %c0_i32_1 = arith.constant 0 : i32
    return %c0_i32, %c0_i32_0 : i32, i32
  }
  func.func @transform_5(%arg0: i32, %arg1: i32) -> (i32, i32, i32) {
    %c0_i32 = arith.constant 0 : i32
    %c0_i32_0 = arith.constant 0 : i32
    %c0_i32_1 = arith.constant 0 : i32
    %c0_i32_2 = arith.constant 0 : i32
    return %c0_i32, %c0_i32_0, %c0_i32_1 : i32, i32, i32
  }
  func.func @transform_6(%arg0: i32, %arg1: i32) -> (i32, i32) {
    %c0_i32 = arith.constant 0 : i32
    %c0_i32_0 = arith.constant 0 : i32
    %c0_i32_1 = arith.constant 0 : i32
    return %c0_i32, %c0_i32_0 : i32, i32
  }
  func.func @transform_7(%arg0: i32, %arg1: i32) -> (i32, i32) {
    %c0_i32 = arith.constant 0 : i32
    %c0_i32_0 = arith.constant 0 : i32
    %c0_i32_1 = arith.constant 0 : i32
    return %c0_i32, %c0_i32_0 : i32, i32
  }
  func.func @transform_8(%arg0: i32, %arg1: i32) -> (i32, i32, i32) {
    %c0_i32 = arith.constant 0 : i32
    %c0_i32_0 = arith.constant 0 : i32
    return %arg0, %arg1, %c0_i32 : i32, i32, i32
  }
  func.func @transform_9(%arg0: i32, %arg1: i32) -> (i32, i32, i32) {
    %c0_i32 = arith.constant 0 : i32
    %c0_i32_0 = arith.constant 0 : i32
    return %arg0, %arg1, %c0_i32 : i32, i32, i32
  }
}

</mosaic_0001>

<llo_original>
// kernel: tpu_custom_call.1
$region0: #{tpu_custom_call.1}
  #allocation0 [shape = 'u32[]', space=smem, size = 0x4, offset = 0x4, fixed_abs, tag = 'smem constant byte address 0x4 - core index']
  #allocation1 [shape = 'u32[144,128]{1,0:T(1,128)}', space=vmem, size = 0x12000, scoped, tag = 'internal scratch']
  %s0 = inlined_call_operand.hbm [shape: f32[2,16,256], index: 0, kind: input, shape index: {}]
  %s1 = inlined_call_operand.hbm [shape: f32[2,16,256], index: 1, kind: input, shape index: {}]
  %s2 = inlined_call_operand.hbm [shape: f32[2,16,256], index: 2, kind: input, shape index: {}]
  %s3 = inlined_call_operand.hbm [shape: bf16[3,128,256], index: 3, kind: input, shape index: {}]
  %s4 = inlined_call_operand.vmem [shape: f32[1,256], index: 4, kind: input, shape index: {}]
  %s5 = inlined_call_operand.hbm [shape: bf16[3,128,256], index: 5, kind: input, shape index: {}]
  %s6 = inlined_call_operand.vmem [shape: f32[1,256], index: 6, kind: input, shape index: {}]
  %s7 = inlined_call_operand.hbm [shape: bf16[256,128], index: 7, kind: input, shape index: {}]
  %s8 = inlined_call_operand.hbm [shape: f32[2,16,256], index: 8, kind: output, shape index: {0}]
  %s9 = inlined_call_operand.hbm [shape: f32[2,16,128], index: 9, kind: output, shape index: {1}]
  %10 = xla_tuple %s8, %s9
  %s11 = sld [smem:[#allocation0]]
  $region97: #{tpu_custom_call.1} parent=0
    _
  %s13 = ssub.s32 1, %s11
  %s14 = scalar_select 0, %s13, %s11
  $region1: #{tpu_custom_call.1} parent=0
    #allocation2 [shape = 'u8[32768]{0}', space=vmem, size = 0x8000, scoped, tag = 'input window, operand 0']
    #allocation3 [shape = 's32[2]{0}', space=sflag, size = 0x8, scoped, tag = 'scoped memory for tpu_custom_call.1']
    #allocation4 [shape = 's32[2]{0}', space=sflag, size = 0x8, scoped, tag = 'scoped memory for tpu_custom_call.1']
    #allocation5 [shape = 'u8[32768]{0}', space=vmem, size = 0x8000, scoped, tag = 'input window, operand 1']
    #allocation6 [shape = 's32[2]{0}', space=sflag, size = 0x8, scoped, tag = 'scoped memory for tpu_custom_call.1']
    #allocation7 [shape = 'u8[32768]{0}', space=vmem, size = 0x8000, scoped, tag = 'input window, operand 2']
    #allocation8 [shape = 'u8[196608]{0}', space=vmem, size = 0x30000, scoped, tag = 'input window, operand 3, single buffered']
    #allocation9 [shape = 's32[1]{0}', space=sflag, size = 0x4, scoped, tag = 'scoped memory for tpu_custom_call.1']
    #allocation10 [shape = 'u8[196608]{0}', space=vmem, size = 0x30000, scoped, tag = 'input window, operand 5, single buffered']
    #allocation11 [shape = 'u8[65536]{0}', space=vmem, size = 0x10000, scoped, tag = 'input window, operand 7, single buffered']
    #allocation12 [shape = 's32[1]{0}', space=sflag, size = 0x4, scoped, tag = 'scoped memory for tpu_custom_call.1']
    #allocation13 [shape = 'u8[32768]{0}', space=vmem, size = 0x8000, scoped, tag = 'output window, operand 0']
    #allocation14 [shape = 'u8[16384]{0}', space=vmem, size = 0x4000, scoped, tag = 'output window, operand 1']
    #allocation15 [shape = 's32[2]{0}', space=sflag, size = 0x8, scoped, tag = 'scoped memory for tpu_custom_call.1']
    %15 = vsyncpa [#allocation3], 0
    %s16 = scalar_lea.sflag [#allocation3], 1
    %17 = vsyncpa %s16, 0
    %18 = vsyncpa [#allocation6], 0
    %s19 = scalar_lea.sflag [#allocation6], 1
    %20 = vsyncpa %s19, 0
    %21 = vsyncpa [#allocation9], 0
    %22 = vsyncpa [#allocation12], 0
    %23 = vsyncpa [#allocation4], 0
    %s24 = scalar_lea.sflag [#allocation4], 1
    %25 = vsyncpa %s24, 0
    %26 = vsyncpa [#allocation15], 0
    %s27 = scalar_lea.sflag [#allocation15], 1
    %28 = vsyncpa %s27, 0
    loop: start=0, step=1, limit=4
    $region2: #{tpu_custom_call.1} parent=1 // loop_pre_header
      _
    $region3: #{tpu_custom_call.1} parent=1 // loop_header
      %s30 = sphi 0, %s34
      %p31 = scmp.ge.s32.totalorder %s30, 4
      %s37 = sphi 0, %s49
      %s38 = sphi 0, %s45
      %s39 = sphi 0, %s37
      %s40 = sphi 0, %s38
      %s41 = sphi 0, %s39
      %s42 = sphi 0, %s40
      %s54 = sphi 0, %s56
      %s57 = sphi 0, %s54
      %s58 = sphi 0, %s57
      %s74 = sphi 0, %s58
      %s88 = sphi 0, %s90
      %s91 = sphi 0, %s88
      %s92 = sphi 0, %s91
      %s108 = sphi 0, %s92
      %s122 = sphi 0, %s124
      %s125 = sphi 0, %s122
      %s126 = sphi 0, %s125
      %s142 = sphi 0, %s126
      %s146 = sphi 0, %s146
      %s148 = sphi 0, %s146
      %s149 = sphi 0, %s148
      %s163 = sphi 0, %s149
      %s167 = sphi 0, %s167
      %s169 = sphi 0, %s167
      %s170 = sphi 0, %s169
      %s184 = sphi 0, %s170
      %s188 = sphi 0, %s188
      %s190 = sphi 0, %s188
      %s191 = sphi 0, %s190
      %s205 = sphi 0, %s191
      %s209 = sphi 0, %s209
      %s211 = sphi 0, %s209
      %s212 = sphi 0, %s211
      %s226 = sphi 0, %s212
      %s230 = sphi 0, %s230
      %s232 = sphi 0, %s230
      %s233 = sphi 0, %s232
      %s247 = sphi 0, %s233
      %s255 = sphi 0, %s257
      %s258 = sphi 0, %s255
      %s259 = sphi 0, %s258
      %s275 = sphi 0, %s259
      %s283 = sphi 0, %s285
      %s286 = sphi 0, %s283
      %s287 = sphi 0, %s286
      %s303 = sphi 0, %s287
    $region4: #{tpu_custom_call.1} parent=1 // loop_header_branch
      %33 = sbr.rel (%p31) target = $region8
    $region5: #{tpu_custom_call.1} parent=1 // loop_body
      %s35 = ssub.s32 %s30, 1
      %s36 = ssub.s32 %s30, 2
      %s43 = sadd.s32 1, %s38
      %p44 = scmp.ge.s32.totalorder %s43, 1
      %s45 = scalar_select %p44, 0, %s43
      %s46 = sadd.s32 1, %s37
      %s47 = scalar_select %p44, %s46, %s37
      %p48 = scmp.ge.s32.totalorder %s47, 2
      %s49 = scalar_select %p48, 0, %s47
      %s50 = ssub.s32 %s37, %s49
      %s51 = ssub.s32 %s38, %s45
      %s52 = sor.u32 %s50, %s51
      %p53 = scmp.eq.s32.totalorder %s52, 0
      %s55 = sadd.s32 %s54, 1
      %s56 = scalar_select %p53, %s54, %s55
      %p59 = pneg %p53
      %p60 = scmp.eq.s32.totalorder %s30, 1
      %p61 = por %p59, %p60
      %p62 = scmp.ne.s32.totalorder %s54, %s57
      %p63 = scmp.eq.s32.totalorder %s30, 0
      %p64 = por %p62, %p63
      %p65 = scmp.ne.s32.totalorder %s54, %s57
      %p66 = scmp.eq.s32.totalorder %s35, 1
      %p67 = por %p65, %p66
      %p68 = scmp.ne.s32.totalorder %s57, %s58
      %p69 = scmp.eq.s32.totalorder %s35, 0
      %p70 = por %p68, %p69
      %p71 = scmp.ne.s32.totalorder %s57, %s58
      %p72 = scmp.eq.s32.totalorder %s36, 1
      %p73 = por %p71, %p72
      %p75 = scmp.ne.s32.totalorder %s58, %s74
      %p76 = scmp.eq.s32.totalorder %s36, 0
      %p77 = por %p75, %p76
      %s78 = ssub.s32 %s38, 1
      %p79 = scmp.gt.s32.totalorder %s78, 0
      %s80 = scalar_select %p79, %s78, 0
      %s81 = ssub.s32 %s45, 1
      %p82 = scmp.gt.s32.totalorder %s81, 0
      %s83 = scalar_select %p82, %s81, 0
      %s84 = ssub.s32 %s37, %s49
      %s85 = ssub.s32 %s80, %s83
      %s86 = sor.u32 %s84, %s85
      %p87 = scmp.eq.s32.totalorder %s86, 0
      %s89 = sadd.s32 %s88, 1
      %s90 = scalar_select %p87, %s88, %s89
      %p93 = pneg %p87
      %p94 = scmp.eq.s32.totalorder %s30, 1
      %p95 = por %p93, %p94
      %p96 = scmp.ne.s32.totalorder %s88, %s91
      %p97 = scmp.eq.s32.totalorder %s30, 0
      %p98 = por %p96, %p97
      %p99 = scmp.ne.s32.totalorder %s88, %s91
      %p100 = scmp.eq.s32.totalorder %s35, 1
      %p101 = por %p99, %p100
      %p102 = scmp.ne.s32.totalorder %s91, %s92
      %p103 = scmp.eq.s32.totalorder %s35, 0
      %p104 = por %p102, %p103
      %p105 = scmp.ne.s32.totalorder %s91, %s92
      %p106 = scmp.eq.s32.totalorder %s36, 1
      %p107 = por %p105, %p106
      %p109 = scmp.ne.s32.totalorder %s92, %s108
      %p110 = scmp.eq.s32.totalorder %s36, 0
      %p111 = por %p109, %p110
      %s112 = sadd.s32 %s38, 1
      %p113 = scmp.lt.s32.totalorder %s112, 0
      %s114 = scalar_select %p113, %s112, 0
      %s115 = sadd.s32 %s45, 1
      %p116 = scmp.lt.s32.totalorder %s115, 0
      %s117 = scalar_select %p116, %s115, 0
      %s118 = ssub.s32 %s37, %s49
      %s119 = ssub.s32 %s114, %s117
      %s120 = sor.u32 %s118, %s119
      %p121 = scmp.eq.s32.totalorder %s120, 0
      %s123 = sadd.s32 %s122, 1
      %s124 = scalar_select %p121, %s122, %s123
      %p127 = pneg %p121
      %p128 = scmp.eq.s32.totalorder %s30, 1
      %p129 = por %p127, %p128
      %p130 = scmp.ne.s32.totalorder %s122, %s125
      %p131 = scmp.eq.s32.totalorder %s30, 0
      %p132 = por %p130, %p131
      %p133 = scmp.ne.s32.totalorder %s122, %s125
      %p134 = scmp.eq.s32.totalorder %s35, 1
      %p135 = por %p133, %p134
      %p136 = scmp.ne.s32.totalorder %s125, %s126
      %p137 = scmp.eq.s32.totalorder %s35, 0
      %p138 = por %p136, %p137
      %p139 = scmp.ne.s32.totalorder %s125, %s126
      %p140 = scmp.eq.s32.totalorder %s36, 1
      %p141 = por %p139, %p140
      %p143 = scmp.ne.s32.totalorder %s126, %s142
      %p144 = scmp.eq.s32.totalorder %s36, 0
      %p145 = por %p143, %p144
      %s147 = sadd.s32 %s146, 1
      %p150 = scmp.eq.s32.totalorder %s30, 1
      %p151 = scmp.ne.s32.totalorder %s146, %s148
      %p152 = scmp.eq.s32.totalorder %s30, 0
      %p153 = por %p151, %p152
      %p154 = scmp.ne.s32.totalorder %s146, %s148
      %p155 = scmp.eq.s32.totalorder %s35, 1
      %p156 = por %p154, %p155
      %p157 = scmp.ne.s32.totalorder %s148, %s149
      %p158 = scmp.eq.s32.totalorder %s35, 0
      %p159 = por %p157, %p158
      %p160 = scmp.ne.s32.totalorder %s148, %s149
      %p161 = scmp.eq.s32.totalorder %s36, 1
      %p162 = por %p160, %p161
      %p164 = scmp.ne.s32.totalorder %s149, %s163
      %p165 = scmp.eq.s32.totalorder %s36, 0
      %p166 = por %p164, %p165
      %s168 = sadd.s32 %s167, 1
      %p171 = scmp.eq.s32.totalorder %s30, 1
      %p172 = scmp.ne.s32.totalorder %s167, %s169
      %p173 = scmp.eq.s32.totalorder %s30, 0
      %p174 = por %p172, %p173
      %p175 = scmp.ne.s32.totalorder %s167, %s169
      %p176 = scmp.eq.s32.totalorder %s35, 1
      %p177 = por %p175, %p176
      %p178 = scmp.ne.s32.totalorder %s169, %s170
      %p179 = scmp.eq.s32.totalorder %s35, 0
      %p180 = por %p178, %p179
      %p181 = scmp.ne.s32.totalorder %s169, %s170
      %p182 = scmp.eq.s32.totalorder %s36, 1
      %p183 = por %p181, %p182
      %p185 = scmp.ne.s32.totalorder %s170, %s184
      %p186 = scmp.eq.s32.totalorder %s36, 0
      %p187 = por %p185, %p186
      %s189 = sadd.s32 %s188, 1
      %p192 = scmp.eq.s32.totalorder %s30, 1
      %p193 = scmp.ne.s32.totalorder %s188, %s190
      %p194 = scmp.eq.s32.totalorder %s30, 0
      %p195 = por %p193, %p194
      %p196 = scmp.ne.s32.totalorder %s188, %s190
      %p197 = scmp.eq.s32.totalorder %s35, 1
      %p198 = por %p196, %p197
      %p199 = scmp.ne.s32.totalorder %s190, %s191
      %p200 = scmp.eq.s32.totalorder %s35, 0
      %p201 = por %p199, %p200
      %p202 = scmp.ne.s32.totalorder %s190, %s191
      %p203 = scmp.eq.s32.totalorder %s36, 1
      %p204 = por %p202, %p203
      %p206 = scmp.ne.s32.totalorder %s191, %s205
      %p207 = scmp.eq.s32.totalorder %s36, 0
      %p208 = por %p206, %p207
      %s210 = sadd.s32 %s209, 1
      %p213 = scmp.eq.s32.totalorder %s30, 1
      %p214 = scmp.ne.s32.totalorder %s209, %s211
      %p215 = scmp.eq.s32.totalorder %s30, 0
      %p216 = por %p214, %p215
      %p217 = scmp.ne.s32.totalorder %s209, %s211
      %p218 = scmp.eq.s32.totalorder %s35, 1
      %p219 = por %p217, %p218
      %p220 = scmp.ne.s32.totalorder %s211, %s212
      %p221 = scmp.eq.s32.totalorder %s35, 0
      %p222 = por %p220, %p221
      %p223 = scmp.ne.s32.totalorder %s211, %s212
      %p224 = scmp.eq.s32.totalorder %s36, 1
      %p225 = por %p223, %p224
      %p227 = scmp.ne.s32.totalorder %s212, %s226
      %p228 = scmp.eq.s32.totalorder %s36, 0
      %p229 = por %p227, %p228
      %s231 = sadd.s32 %s230, 1
      %p234 = scmp.eq.s32.totalorder %s30, 1
      %p235 = scmp.ne.s32.totalorder %s230, %s232
      %p236 = scmp.eq.s32.totalorder %s30, 0
      %p237 = por %p235, %p236
      %p238 = scmp.ne.s32.totalorder %s230, %s232
      %p239 = scmp.eq.s32.totalorder %s35, 1
      %p240 = por %p238, %p239
      %p241 = scmp.ne.s32.totalorder %s232, %s233
      %p242 = scmp.eq.s32.totalorder %s35, 0
      %p243 = por %p241, %p242
      %p244 = scmp.ne.s32.totalorder %s232, %s233
      %p245 = scmp.eq.s32.totalorder %s36, 1
      %p246 = por %p244, %p245
      %p248 = scmp.ne.s32.totalorder %s233, %s247
      %p249 = scmp.eq.s32.totalorder %s36, 0
      %p250 = por %p248, %p249
      %s251 = ssub.s32 %s37, %s49
      %s252 = ssub.s32 %s38, %s45
      %s253 = sor.u32 %s251, %s252
      %p254 = scmp.eq.s32.totalorder %s253, 0
      %s256 = sadd.s32 %s255, 1
      %s257 = scalar_select %p254, %s255, %s256
      %p260 = pneg %p254
      %p261 = scmp.eq.s32.totalorder %s30, 1
      %p262 = por %p260, %p261
      %p263 = scmp.ne.s32.totalorder %s255, %s258
      %p264 = scmp.eq.s32.totalorder %s30, 0
      %p265 = por %p263, %p264
      %p266 = scmp.ne.s32.totalorder %s255, %s258
      %p267 = scmp.eq.s32.totalorder %s35, 1
      %p268 = por %p266, %p267
      %p269 = scmp.ne.s32.totalorder %s258, %s259
      %p270 = scmp.eq.s32.totalorder %s35, 0
      %p271 = por %p269, %p270
      %p272 = scmp.ne.s32.totalorder %s258, %s259
      %p273 = scmp.eq.s32.totalorder %s36, 1
      %p274 = por %p272, %p273
      %p276 = scmp.ne.s32.totalorder %s259, %s275
      %p277 = scmp.eq.s32.totalorder %s36, 0
      %p278 = por %p276, %p277
      %s279 = ssub.s32 %s37, %s49
      %s280 = ssub.s32 %s38, %s45
      %s281 = sor.u32 %s279, %s280
      %p282 = scmp.eq.s32.totalorder %s281, 0
      %s284 = sadd.s32 %s283, 1
      %s285 = scalar_select %p282, %s283, %s284
      %p288 = pneg %p282
      %p289 = scmp.eq.s32.totalorder %s30, 1
      %p290 = por %p288, %p289
      %p291 = scmp.ne.s32.totalorder %s283, %s286
      %p292 = scmp.eq.s32.totalorder %s30, 0
      %p293 = por %p291, %p292
      %p294 = scmp.ne.s32.totalorder %s283, %s286
      %p295 = scmp.eq.s32.totalorder %s35, 1
      %p296 = por %p294, %p295
      %p297 = scmp.ne.s32.totalorder %s286, %s287
      %p298 = scmp.eq.s32.totalorder %s35, 0
      %p299 = por %p297, %p298
      %p300 = scmp.ne.s32.totalorder %s286, %s287
      %p301 = scmp.eq.s32.totalorder %s36, 1
      %p302 = por %p300, %p301
      %p304 = scmp.ne.s32.totalorder %s287, %s303
      %p305 = scmp.eq.s32.totalorder %s36, 0
      %p306 = por %p304, %p305
      %p307 = scmp.le.s32.totalorder 1, %s30
      %p308 = scmp.lt.s32.totalorder %s30, 3
      %p309 = pnand %p307, %p308
      %p310 = pneg %p309
      // Predicated region
      $region9: #{tpu_custom_call.1} parent=5 // pred_check
        _
      $region10: #{tpu_custom_call.1} parent=5 // pred_check_branch
        %312 = sbr.rel (%p309) target = $region12
      $region11: #{tpu_custom_call.1} parent=5 // pred_region
        %s313 = ssub.s32 %s30, 1
        // Predicated region
        $region13: #{tpu_custom_call.1} parent=11 // pred_check
          %p314 = pneg %p159
        $region14: #{tpu_custom_call.1} parent=11 // pred_check_branch
          %316 = sbr.rel (%p314) target = $region16
        $region15: #{tpu_custom_call.1} parent=11 // pred_region
          %s318 = ssub.s32 6144, 6144
          %319 = vsyncadd [#allocation9], %s318
          %s320 = sshll.u32 [#allocation8], 4
          %s321 = int_to_ptr.vmem [resolvable:$true] %s320
          %326 = dma.hbm_to_vmem [thread:$0]  %s3, 6144, %s321, [#allocation9], 128, 128, 8
        $region16: #{tpu_custom_call.1} parent=11 // pred_fallthru
          _
        // Predicated region
        $region17: #{tpu_custom_call.1} parent=11 // pred_check
          %p327 = pneg %p180
        $region18: #{tpu_custom_call.1} parent=11 // pred_check_branch
          %329 = sbr.rel (%p327) target = $region20
        $region19: #{tpu_custom_call.1} parent=11 // pred_region
          _
        $region20: #{tpu_custom_call.1} parent=11 // pred_fallthru
          _
        // Predicated region
        $region21: #{tpu_custom_call.1} parent=11 // pred_check
          %p330 = pneg %p201
        $region22: #{tpu_custom_call.1} parent=11 // pred_check_branch
          %332 = sbr.rel (%p330) target = $region24
        $region23: #{tpu_custom_call.1} parent=11 // pred_region
          %s334 = ssub.s32 6144, 6144
          %335 = vsyncadd [#allocation9], %s334
          %s336 = sshll.u32 [#allocation10], 4
          %s337 = int_to_ptr.vmem [resolvable:$true] %s336
          %342 = dma.hbm_to_vmem [thread:$0]  %s5, 6144, %s337, [#allocation9], 128, 128, 8
        $region24: #{tpu_custom_call.1} parent=11 // pred_fallthru
          _
        // Predicated region
        $region25: #{tpu_custom_call.1} parent=11 // pred_check
          %p343 = pneg %p222
        $region26: #{tpu_custom_call.1} parent=11 // pred_check_branch
          %345 = sbr.rel (%p343) target = $region28
        $region27: #{tpu_custom_call.1} parent=11 // pred_region
          _
        $region28: #{tpu_custom_call.1} parent=11 // pred_fallthru
          _
        // Predicated region
        $region29: #{tpu_custom_call.1} parent=11 // pred_check
          %p346 = pneg %p243
        $region30: #{tpu_custom_call.1} parent=11 // pred_check_branch
          %348 = sbr.rel (%p346) target = $region32
        $region31: #{tpu_custom_call.1} parent=11 // pred_region
          %s350 = ssub.s32 2048, 2048
          %351 = vsyncadd [#allocation12], %s350
          %s352 = sshll.u32 [#allocation11], 4
          %s353 = int_to_ptr.vmem [resolvable:$true] %s352
          %358 = dma.hbm_to_vmem [thread:$0]  %s7, 2048, %s353, [#allocation12], 64, 64, 4
        $region32: #{tpu_custom_call.1} parent=11 // pred_fallthru
          _
      $region12: #{tpu_custom_call.1} parent=5 // pred_fallthru
        _
      %p359 = scmp.lt.s32.totalorder %s30, 2
      // Predicated region
      $region33: #{tpu_custom_call.1} parent=5 // pred_check
        %p360 = pneg %p359
      $region34: #{tpu_custom_call.1} parent=5 // pred_check_branch
        %362 = sbr.rel (%p360) target = $region36
      $region35: #{tpu_custom_call.1} parent=5 // pred_region
        // Predicated region
        $region37: #{tpu_custom_call.1} parent=35 // pred_check
          %p363 = pneg %p64
        $region38: #{tpu_custom_call.1} parent=35 // pred_check_branch
          %365 = sbr.rel (%p363) target = $region40
        $region39: #{tpu_custom_call.1} parent=35 // pred_region
          %s366 = sand.u32 %s54, 1
          %s367 = scalar_lea.sflag [#allocation3], %s366
          %s368 = sand.u32 %s54, 1
          %s369 = smul.addr %s368, 32
          %s370 = scalar_lea.vmem [#allocation2], %s369
          %s371 = smul.u32 2, %s38
          %s373 = ssub.s32 512, 512
          %374 = vsyncadd %s367, %s373
          %s375 = smul.addr %s371, 2
          %s376 = smul.addr %s37, 4
          %s377 = sadd.s32 %s375, %s376
          %s378 = smul.addr %s377, 128
          %s379 = scalar_lea.hbm %s0, %s378
          %s380 = sshll.u32 %s370, 4
          %s381 = int_to_ptr.vmem [resolvable:$true] %s380
          %386 = dma.hbm_to_vmem [thread:$0]  %s379, 512, %s381, %s367, 256, 256, 16
        $region40: #{tpu_custom_call.1} parent=35 // pred_fallthru
          _
        // Predicated region
        $region41: #{tpu_custom_call.1} parent=35 // pred_check
          %p387 = pneg %p98
        $region42: #{tpu_custom_call.1} parent=35 // pred_check_branch
          %389 = sbr.rel (%p387) target = $region44
        $region43: #{tpu_custom_call.1} parent=35 // pred_region
          %s390 = sand.u32 %s30, 1
          %s391 = scalar_lea.sflag [#allocation6], %s390
          %s392 = sand.u32 %s88, 1
          %s393 = smul.addr %s392, 32
          %s394 = scalar_lea.vmem [#allocation5], %s393
          %s395 = ssub.s32 %s38, 1
          %p396 = scmp.gt.s32.totalorder %s395, 0
          %s397 = scalar_select %p396, %s395, 0
          %s398 = smul.u32 2, %s397
          %s400 = ssub.s32 512, 512
          %401 = vsyncadd %s391, %s400
          %s402 = smul.addr %s398, 2
          %s403 = smul.addr %s37, 4
          %s404 = sadd.s32 %s402, %s403
          %s405 = smul.addr %s404, 128
          %s406 = scalar_lea.hbm %s1, %s405
          %s407 = sshll.u32 %s394, 4
          %s408 = int_to_ptr.vmem [resolvable:$true] %s407
          %413 = dma.hbm_to_vmem [thread:$0]  %s406, 512, %s408, %s391, 256, 256, 16
        $region44: #{tpu_custom_call.1} parent=35 // pred_fallthru
          _
        // Predicated region
        $region45: #{tpu_custom_call.1} parent=35 // pred_check
          %p414 = pneg %p132
        $region46: #{tpu_custom_call.1} parent=35 // pred_check_branch
          %416 = sbr.rel (%p414) target = $region48
        $region47: #{tpu_custom_call.1} parent=35 // pred_region
          %s417 = sand.u32 %s30, 1
          %s418 = scalar_lea.sflag [#allocation6], %s417
          %s419 = sand.u32 %s122, 1
          %s420 = smul.addr %s419, 32
          %s421 = scalar_lea.vmem [#allocation7], %s420
          %s422 = sadd.s32 %s38, 1
          %p423 = scmp.lt.s32.totalorder %s422, 0
          %s424 = scalar_select %p423, %s422, 0
          %s425 = smul.u32 2, %s424
          %s427 = ssub.s32 512, 512
          %428 = vsyncadd %s418, %s427
          %s429 = smul.addr %s425, 2
          %s430 = smul.addr %s37, 4
          %s431 = sadd.s32 %s429, %s430
          %s432 = smul.addr %s431, 128
          %s433 = scalar_lea.hbm %s2, %s432
          %s434 = sshll.u32 %s421, 4
          %s435 = int_to_ptr.vmem [resolvable:$true] %s434
          %440 = dma.hbm_to_vmem [thread:$0]  %s433, 512, %s435, %s418, 256, 256, 16
        $region48: #{tpu_custom_call.1} parent=35 // pred_fallthru
          _
      $region36: #{tpu_custom_call.1} parent=5 // pred_fallthru
        _
      %p441 = scmp.le.s32.totalorder 1, %s30
      %p442 = scmp.lt.s32.totalorder %s30, 3
      %p443 = pnand %p441, %p442
      %p444 = pneg %p443
      // Predicated region
      $region49: #{tpu_custom_call.1} parent=5 // pred_check
        _
      $region50: #{tpu_custom_call.1} parent=5 // pred_check_branch
        %446 = sbr.rel (%p443) target = $region52
      $region51: #{tpu_custom_call.1} parent=5 // pred_region
        %s447 = ssub.s32 %s30, 1
        %s448 = sand.u32 %s57, 1
        %s449 = scalar_lea.sflag [#allocation3], %s448
        %s450 = sand.u32 %s57, 1
        %s451 = smul.addr %s450, 32
        %s452 = scalar_lea.vmem [#allocation2], %s451
        // Predicated region
        $region53: #{tpu_custom_call.1} parent=51 // pred_check
          %p453 = pneg %p70
        $region54: #{tpu_custom_call.1} parent=51 // pred_check_branch
          %455 = sbr.rel (%p453) target = $region56
        $region55: #{tpu_custom_call.1} parent=51 // pred_region
          %456 = dma.done %s449, 512
        $region56: #{tpu_custom_call.1} parent=51 // pred_fallthru
          _
        %s457 = sand.u32 %s35, 1
        %s458 = scalar_lea.sflag [#allocation6], %s457
        %s459 = sand.u32 %s91, 1
        %s460 = smul.addr %s459, 32
        %s461 = scalar_lea.vmem [#allocation5], %s460
        // Predicated region
        $region57: #{tpu_custom_call.1} parent=51 // pred_check
          %p462 = pneg %p104
        $region58: #{tpu_custom_call.1} parent=51 // pred_check_branch
          %464 = sbr.rel (%p462) target = $region60
        $region59: #{tpu_custom_call.1} parent=51 // pred_region
          %465 = dma.done %s458, 512
        $region60: #{tpu_custom_call.1} parent=51 // pred_fallthru
          _
        %s466 = sand.u32 %s35, 1
        %s467 = scalar_lea.sflag [#allocation6], %s466
        %s468 = sand.u32 %s125, 1
        %s469 = smul.addr %s468, 32
        %s470 = scalar_lea.vmem [#allocation7], %s469
        // Predicated region
        $region61: #{tpu_custom_call.1} parent=51 // pred_check
          %p471 = pneg %p138
        $region62: #{tpu_custom_call.1} parent=51 // pred_check_branch
          %473 = sbr.rel (%p471) target = $region64
        $region63: #{tpu_custom_call.1} parent=51 // pred_region
          %474 = dma.done %s467, 512
        $region64: #{tpu_custom_call.1} parent=51 // pred_fallthru
          _
        // Predicated region
        $region65: #{tpu_custom_call.1} parent=51 // pred_check
          %p475 = pneg %p159
        $region66: #{tpu_custom_call.1} parent=51 // pred_check_branch
          %477 = sbr.rel (%p475) target = $region68
        $region67: #{tpu_custom_call.1} parent=51 // pred_region
          %478 = dma.done [#allocation9], 6144
        $region68: #{tpu_custom_call.1} parent=51 // pred_fallthru
          _
        // Predicated region
        $region69: #{tpu_custom_call.1} parent=51 // pred_check
          %p479 = pneg %p201
        $region70: #{tpu_custom_call.1} parent=51 // pred_check_branch
          %481 = sbr.rel (%p479) target = $region72
        $region71: #{tpu_custom_call.1} parent=51 // pred_region
          %482 = dma.done [#allocation9], 6144
        $region72: #{tpu_custom_call.1} parent=51 // pred_fallthru
          _
        // Predicated region
        $region73: #{tpu_custom_call.1} parent=51 // pred_check
          %p483 = pneg %p243
        $region74: #{tpu_custom_call.1} parent=51 // pred_check_branch
          %485 = sbr.rel (%p483) target = $region76
        $region75: #{tpu_custom_call.1} parent=51 // pred_region
          %486 = dma.done [#allocation12], 2048
        $region76: #{tpu_custom_call.1} parent=51 // pred_fallthru
          _
        %s487 = sand.u32 %s57, 1
        %s488 = scalar_lea.sflag [#allocation3], %s487
        %s489 = sand.u32 %s57, 1
        %s490 = smul.addr %s489, 32
        %s491 = scalar_lea.vmem [#allocation2], %s490
        %p492 = pneg %p70
        %p493 = pneg %p67
        %s494 = sand.u32 %s35, 1
        %s495 = scalar_lea.sflag [#allocation6], %s494
        %s496 = sand.u32 %s91, 1
        %s497 = smul.addr %s496, 32
        %s498 = scalar_lea.vmem [#allocation5], %s497
        %p499 = pneg %p104
        %p500 = pneg %p101
        %s501 = sand.u32 %s35, 1
        %s502 = scalar_lea.sflag [#allocation6], %s501
        %s503 = sand.u32 %s125, 1
        %s504 = smul.addr %s503, 32
        %s505 = scalar_lea.vmem [#allocation7], %s504
        %p506 = pneg %p138
        %p507 = pneg %p135
        %p508 = pneg %p159
        %p509 = pneg %p156
        %p510 = pneg %p180
        %p511 = pneg %p177
        %p512 = pneg %p201
        %p513 = pneg %p198
        %p514 = pneg %p222
        %p515 = pneg %p219
        %p516 = pneg %p243
        %p517 = pneg %p240
        %p518 = pneg %p271
        %p519 = pneg %p268
        %s520 = sand.u32 %s258, 1
        %s521 = scalar_lea.sflag [#allocation4], %s520
        %s522 = sand.u32 %s258, 1
        %s523 = smul.addr %s522, 32
        %s524 = scalar_lea.vmem [#allocation13], %s523
        %p525 = pneg %p299
        %p526 = pneg %p296
        %s527 = sand.u32 %s286, 1
        %s528 = scalar_lea.sflag [#allocation15], %s527
        %s529 = sand.u32 %s286, 1
        %s530 = smul.addr %s529, 16
        %s531 = scalar_lea.vmem [#allocation14], %s530
        %s532 = smul.u32 2, %s40
        %s533 = ssub.s32 %s40, 1
        %p534 = scmp.gt.s32.totalorder %s533, 0
        %s535 = scalar_select %p534, %s533, 0
        %s536 = smul.u32 2, %s535
        %s537 = sadd.s32 %s40, 1
        %p538 = scmp.lt.s32.totalorder %s537, 0
        %s539 = scalar_select %p538, %s537, 0
        %s540 = smul.u32 2, %s539
        %s541 = smul.u32 2, %s40
        %s542 = smul.u32 2, %s40
        %p544 = scmp.eq.s32.totalorder %s40, 0
        %v545 = vld [vmem:[%s452] sm:$0xff]
        %v546 = vld [vmem:[%s452 + $0x8] sm:$0xff]
        %v547 = vld [vmem:[%s452 + $0x10] sm:$0xff]
        %v548 = vld [vmem:[%s452 + $0x18] sm:$0xff]
        %v549 = vld [vmem:[%s461 + $0x10] sm:$0xff]
        %v550 = vld [vmem:[%s461 + $0x18] sm:$0xff]
        %v551 = vld [vmem:[%s470] sm:$0xff]
        %v552 = vld [vmem:[%s470 + $0x8] sm:$0xff]
        %s553 = scalar_select %p544, 1, 0
        %v554 = vstv %s553
        %vm555 = vcmp.eq.s32.totalorder %v554, 1
        %v556 = vsel %vm555, 0.0, %v549
        %v557 = vsel %vm555, 0.0, %v550
        %v558 = vsel %vm555, 0.0, %v551
        %v559 = vsel %vm555, 0.0, %v552
        %v560 = vlaneseq
        %v561 = vshrl.u32 %v560, 7
        %v562 = vadd.s32 %v561, 8
        %vm563 = vcmp.eq.s32.totalorder %v561, 0
        %vm564 = vcmp.eq.s32.totalorder %v562, 0
        %v565 = vrot.slane %v545, 7
        %v566 = vrot.slane %v546, 7
        %v567 = vrot.slane %v547, 7
        %v568 = vrot.slane %v548, 7
        %vm569 = vcmp.lt.s32.totalorder %v561, 1
        %v570 = vsel %vm569, %v565, %v567
        %v571 = vsel %vm569, %v566, %v568
        %v572 = vsel %vm569, %v567, %v565
        %v573 = vsel %vm569, %v568, %v566
        %v574 = vsel %vm563, 1, 0
        %v575 = vsel %vm564, 1, 0
        %vm576 = vcmp.eq.s32.totalorder %v574, 1
        %vm577 = vcmp.eq.s32.totalorder %v575, 1
        %v578 = vlaneseq
        %v579 = vshrl.u32 %v578, 7
        %v580 = vsub.s32 7, %v579
        %v581 = vrot.slane %v556, %v580
        %v582 = vlaneseq
        %v583 = vshrl.u32 %v582, 7
        %v584 = vsub.s32 7, %v583
        %v585 = vrot.slane %v557, %v584
        %v586 = vsel %vm576, %v581, %v572
        %v587 = vsel %vm576, %v585, %v573
        %v588 = vsel %vm577, %v581, %v570
        %v589 = vsel %vm577, %v585, %v571
        %vm590 = vcmp.eq.s32.totalorder %v561, 15
        %vm591 = vcmp.eq.s32.totalorder %v562, 15
        %v592 = vrot.slane %v545, 1
        %v593 = vrot.slane %v546, 1
        %v594 = vrot.slane %v547, 1
        %v595 = vrot.slane %v548, 1
        %vm596 = vcmp.lt.s32.totalorder %v561, 7
        %v597 = vsel %vm596, %v592, %v594
        %v598 = vsel %vm596, %v593, %v595
        %v599 = vsel %vm596, %v594, %v592
        %v600 = vsel %vm596, %v595, %v593
        %v601 = vsel %vm590, 1, 0
        %v602 = vsel %vm591, 1, 0
        %vm603 = vcmp.eq.s32.totalorder %v601, 1
        %vm604 = vcmp.eq.s32.totalorder %v602, 1
        %v605 = vlaneseq
        %v606 = vshrl.u32 %v605, 7
        %v607 = vsub.s32 0, %v606
        %v608 = vrot.slane %v558, %v607
        %v609 = vlaneseq
        %v610 = vshrl.u32 %v609, 7
        %v611 = vsub.s32 0, %v610
        %v612 = vrot.slane %v559, %v611
        %v613 = vsel %vm603, %v608, %v597
        %v614 = vsel %vm603, %v612, %v598
        %v615 = vsel %vm604, %v608, %v599
        %v616 = vsel %vm604, %v612, %v600
        %v617 = vpack.c.bf16 %v588, %v586
        %v618 = vpack.c.bf16 %v589, %v587
        %v619 = vpack.c.bf16 %v547, %v545
        %v620 = vpack.c.bf16 %v548, %v546
        %v621 = vpack.c.bf16 %v615, %v613
        %v622 = vpack.c.bf16 %v616, %v614
        %v623 = vld [vmem:[#allocation8] sm:$0xff]
        %v624 = vld [vmem:[#allocation8 + $0x8] sm:$0xff]
        %v625 = vld [vmem:[#allocation8 + $0x10] sm:$0xff]
        %v626 = vld [vmem:[#allocation8 + $0x18] sm:$0xff]
        %v627 = vld [vmem:[#allocation8 + $0x20] sm:$0xff]
        %v628 = vld [vmem:[#allocation8 + $0x28] sm:$0xff]
        %v629 = vld [vmem:[#allocation8 + $0x30] sm:$0xff]
        %v630 = vld [vmem:[#allocation8 + $0x38] sm:$0xff]
        %v631 = vld [vmem:[#allocation8 + $0x40] sm:$0xff]
        %v632 = vld [vmem:[#allocation8 + $0x48] sm:$0xff]
        %v633 = vld [vmem:[#allocation8 + $0x50] sm:$0xff]
        %v634 = vld [vmem:[#allocation8 + $0x58] sm:$0xff]
        %v635 = vld [vmem:[#allocation8 + $0x60] sm:$0xff]
        %v636 = vld [vmem:[#allocation8 + $0x68] sm:$0xff]
        %v637 = vld [vmem:[#allocation8 + $0x70] sm:$0xff]
        %v638 = vld [vmem:[#allocation8 + $0x78] sm:$0xff]
        %s639 = scalar_lea.vmem [#allocation8], 128
        %v640 = vld [vmem:[%s639] sm:$0xff]
        %v641 = vld [vmem:[%s639 + $0x8] sm:$0xff]
        %v642 = vld [vmem:[%s639 + $0x10] sm:$0xff]
        %v643 = vld [vmem:[%s639 + $0x18] sm:$0xff]
        %v644 = vld [vmem:[%s639 + $0x20] sm:$0xff]
        %v645 = vld [vmem:[%s639 + $0x28] sm:$0xff]
        %v646 = vld [vmem:[%s639 + $0x30] sm:$0xff]
        %v647 = vld [vmem:[%s639 + $0x38] sm:$0xff]
        %v648 = vld [vmem:[%s639 + $0x40] sm:$0xff]
        %v649 = vld [vmem:[%s639 + $0x48] sm:$0xff]
        %v650 = vld [vmem:[%s639 + $0x50] sm:$0xff]
        %v651 = vld [vmem:[%s639 + $0x58] sm:$0xff]
        %v652 = vld [vmem:[%s639 + $0x60] sm:$0xff]
        %v653 = vld [vmem:[%s639 + $0x68] sm:$0xff]
        %v654 = vld [vmem:[%s639 + $0x70] sm:$0xff]
        %v655 = vld [vmem:[%s639 + $0x78] sm:$0xff]
        %v672 = vunpack.c.l.b16 %v640
        %v673 = vunpack.c.h.b16 %v640
        %v674 = vunpack.c.l.b16 %v641
        %v675 = vunpack.c.h.b16 %v641
        %v676 = vunpack.c.l.b16 %v642
        %v677 = vunpack.c.h.b16 %v642
        %v678 = vunpack.c.l.b16 %v643
        %v679 = vunpack.c.h.b16 %v643
        %v680 = vunpack.c.l.b16 %v644
        %v681 = vunpack.c.h.b16 %v644
        %v682 = vunpack.c.l.b16 %v645
        %v683 = vunpack.c.h.b16 %v645
        %v684 = vunpack.c.l.b16 %v646
        %v685 = vunpack.c.h.b16 %v646
        %v686 = vunpack.c.l.b16 %v647
        %v687 = vunpack.c.h.b16 %v647
        %v688 = vunpack.c.l.b16 %v648
        %v689 = vunpack.c.h.b16 %v648
        %v690 = vunpack.c.l.b16 %v649
        %v691 = vunpack.c.h.b16 %v649
        %v692 = vunpack.c.l.b16 %v650
        %v693 = vunpack.c.h.b16 %v650
        %v694 = vunpack.c.l.b16 %v651
        %v695 = vunpack.c.h.b16 %v651
        %v696 = vunpack.c.l.b16 %v652
        %v697 = vunpack.c.h.b16 %v652
        %v698 = vunpack.c.l.b16 %v653
        %v699 = vunpack.c.h.b16 %v653
        %v700 = vunpack.c.l.b16 %v654
        %v701 = vunpack.c.h.b16 %v654
        %v702 = vunpack.c.l.b16 %v655
        %v703 = vunpack.c.h.b16 %v655
        %v704 = vpack.c.b16 %v674, %v672
        %v705 = vpack.c.b16 %v675, %v673
        %v706 = vpack.c.b16 %v678, %v676
        %v707 = vpack.c.b16 %v679, %v677
        %v708 = vpack.c.b16 %v682, %v680
        %v709 = vpack.c.b16 %v683, %v681
        %v710 = vpack.c.b16 %v686, %v684
        %v711 = vpack.c.b16 %v687, %v685
        %v712 = vpack.c.b16 %v690, %v688
        %v713 = vpack.c.b16 %v691, %v689
        %v714 = vpack.c.b16 %v694, %v692
        %v715 = vpack.c.b16 %v695, %v693
        %v716 = vpack.c.b16 %v698, %v696
        %v717 = vpack.c.b16 %v699, %v697
        %v718 = vpack.c.b16 %v702, %v700
        %v719 = vpack.c.b16 %v703, %v701
        %736 = vmatprep.subr.bf16.mxu0 %v719
        %737 = vmatpush1.bf16.msra.mxu0 %v718
        %738 = vmatprep.subr.bf16.mxu0 %v717
        %739 = vmatpush1.bf16.msra.mxu0 %v716
        %740 = vmatprep.subr.bf16.mxu0 %v715
        %741 = vmatpush1.bf16.msra.mxu0 %v714
        %742 = vmatprep.subr.bf16.mxu0 %v713
        %743 = vmatpush1.bf16.msra.mxu0 %v712
        %744 = vmatprep.subr.bf16.mxu0 %v711
        %745 = vmatpush1.bf16.msra.mxu0 %v710
        %746 = vmatprep.subr.bf16.mxu0 %v709
        %747 = vmatpush1.bf16.msra.mxu0 %v708
        %748 = vmatprep.subr.bf16.mxu0 %v707
        %749 = vmatpush1.bf16.msra.mxu0 %v706
        %750 = vmatprep.subr.bf16.mxu0 %v705
        %751 = vmatpush1.bf16.msra.mxu0 %v704
        %752 = vmatprep.subr.bf16.mxu0 0
        %753 = vmatpush2.bf16.msra.mxu0 0
        %754 = vmatprep.subr.bf16.mxu0 0
        %755 = vmatpush2.bf16.msra.mxu0 0
        %756 = vmatprep.subr.bf16.mxu0 0
        %757 = vmatpush2.bf16.msra.mxu0 0
        %758 = vmatprep.subr.bf16.mxu0 0
        %759 = vmatpush2.bf16.msra.mxu0 0
        %760 = vmatprep.subr.bf16.mxu0 0
        %761 = vmatpush2.bf16.msra.mxu0 0
        %762 = vmatprep.subr.bf16.mxu0 0
        %763 = vmatpush2.bf16.msra.mxu0 0
        %764 = vmatprep.subr.bf16.mxu0 0
        %765 = vmatpush2.bf16.msra.mxu0 0
        %766 = vmatprep.subr.bf16.mxu0 0
        %767 = vmatpush2.bf16.msra.mxu0 0
        %768 = vmatprep.mubr.bf16.mxu0 0
        %769 = vmatmul.mubr.bf16.gmra.mxu0 %v619
        %v770 = vpop.f32.mrf.mxu0
        %v771 = vadd.f32 0.0, %v770
        %v772 = vpop.f32.mrf.mxu0
        %v773 = vadd.f32 0.0, %v772
        %v774 = vpop.f32.mrf.mxu0
        %v775 = vadd.f32 0.0, %v774
        %v776 = vpop.f32.mrf.mxu0
        %v777 = vadd.f32 0.0, %v776
        %778 = vdwg.mxu0
        %v795 = vunpack.c.l.b16 %v623
        %v796 = vunpack.c.h.b16 %v623
        %v797 = vunpack.c.l.b16 %v624
        %v798 = vunpack.c.h.b16 %v624
        %v799 = vunpack.c.l.b16 %v625
        %v800 = vunpack.c.h.b16 %v625
        %v801 = vunpack.c.l.b16 %v626
        %v802 = vunpack.c.h.b16 %v626
        %v803 = vunpack.c.l.b16 %v627
        %v804 = vunpack.c.h.b16 %v627
        %v805 = vunpack.c.l.b16 %v628
        %v806 = vunpack.c.h.b16 %v628
        %v807 = vunpack.c.l.b16 %v629
        %v808 = vunpack.c.h.b16 %v629
        %v809 = vunpack.c.l.b16 %v630
        %v810 = vunpack.c.h.b16 %v630
        %v811 = vunpack.c.l.b16 %v631
        %v812 = vunpack.c.h.b16 %v631
        %v813 = vunpack.c.l.b16 %v632
        %v814 = vunpack.c.h.b16 %v632
        %v815 = vunpack.c.l.b16 %v633
        %v816 = vunpack.c.h.b16 %v633
        %v817 = vunpack.c.l.b16 %v634
        %v818 = vunpack.c.h.b16 %v634
        %v819 = vunpack.c.l.b16 %v635
        %v820 = vunpack.c.h.b16 %v635
        %v821 = vunpack.c.l.b16 %v636
        %v822 = vunpack.c.h.b16 %v636
        %v823 = vunpack.c.l.b16 %v637
        %v824 = vunpack.c.h.b16 %v637
        %v825 = vunpack.c.l.b16 %v638
        %v826 = vunpack.c.h.b16 %v638
        %v827 = vpack.c.b16 %v797, %v795
        %v828 = vpack.c.b16 %v798, %v796
        %v829 = vpack.c.b16 %v801, %v799
        %v830 = vpack.c.b16 %v802, %v800
        %v831 = vpack.c.b16 %v805, %v803
        %v832 = vpack.c.b16 %v806, %v804
        %v833 = vpack.c.b16 %v809, %v807
        %v834 = vpack.c.b16 %v810, %v808
        %v835 = vpack.c.b16 %v813, %v811
        %v836 = vpack.c.b16 %v814, %v812
        %v837 = vpack.c.b16 %v817, %v815
        %v838 = vpack.c.b16 %v818, %v816
        %v839 = vpack.c.b16 %v821, %v819
        %v840 = vpack.c.b16 %v822, %v820
        %v841 = vpack.c.b16 %v825, %v823
        %v842 = vpack.c.b16 %v826, %v824
        %859 = vmatprep.subr.bf16.mxu0 %v842
        %860 = vmatpush1.bf16.msra.mxu0 %v841
        %861 = vmatprep.subr.bf16.mxu0 %v840
        %862 = vmatpush1.bf16.msra.mxu0 %v839
        %863 = vmatprep.subr.bf16.mxu0 %v838
        %864 = vmatpush1.bf16.msra.mxu0 %v837
        %865 = vmatprep.subr.bf16.mxu0 %v836
        %866 = vmatpush1.bf16.msra.mxu0 %v835
        %867 = vmatprep.subr.bf16.mxu0 %v834
        %868 = vmatpush1.bf16.msra.mxu0 %v833
        %869 = vmatprep.subr.bf16.mxu0 %v832
        %870 = vmatpush1.bf16.msra.mxu0 %v831
        %871 = vmatprep.subr.bf16.mxu0 %v830
        %872 = vmatpush1.bf16.msra.mxu0 %v829
        %873 = vmatprep.subr.bf16.mxu0 %v828
        %874 = vmatpush1.bf16.msra.mxu0 %v827
        %875 = vmatprep.subr.bf16.mxu0 0
        %876 = vmatpush2.bf16.msra.mxu0 0
        %877 = vmatprep.subr.bf16.mxu0 0
        %878 = vmatpush2.bf16.msra.mxu0 0
        %879 = vmatprep.subr.bf16.mxu0 0
        %880 = vmatpush2.bf16.msra.mxu0 0
        %881 = vmatprep.subr.bf16.mxu0 0
        %882 = vmatpush2.bf16.msra.mxu0 0
        %883 = vmatprep.subr.bf16.mxu0 0
        %884 = vmatpush2.bf16.msra.mxu0 0
        %885 = vmatprep.subr.bf16.mxu0 0
        %886 = vmatpush2.bf16.msra.mxu0 0
        %887 = vmatprep.subr.bf16.mxu0 0
        %888 = vmatpush2.bf16.msra.mxu0 0
        %889 = vmatprep.subr.bf16.mxu0 0
        %890 = vmatpush2.bf16.msra.mxu0 0
        %891 = vmatprep.mubr.bf16.mxu0 0
        %892 = vmatmul.mubr.bf16.gmra.mxu0 %v617
        %v893 = vpop.f32.mrf.mxu0
        %v894 = vadd.f32 %v771, %v893
        %v895 = vpop.f32.mrf.mxu0
        %v896 = vadd.f32 %v773, %v895
        %v897 = vpop.f32.mrf.mxu0
        %v898 = vadd.f32 %v775, %v897
        %v899 = vpop.f32.mrf.mxu0
        %v900 = vadd.f32 %v777, %v899
        %901 = vdwg.mxu0
        %s902 = scalar_lea.vmem [#allocation8], 256
        %v903 = vld [vmem:[%s902] sm:$0xff]
        %v904 = vld [vmem:[%s902 + $0x8] sm:$0xff]
        %v905 = vld [vmem:[%s902 + $0x10] sm:$0xff]
        %v906 = vld [vmem:[%s902 + $0x18] sm:$0xff]
        %v907 = vld [vmem:[%s902 + $0x20] sm:$0xff]
        %v908 = vld [vmem:[%s902 + $0x28] sm:$0xff]
        %v909 = vld [vmem:[%s902 + $0x30] sm:$0xff]
        %v910 = vld [vmem:[%s902 + $0x38] sm:$0xff]
        %v911 = vld [vmem:[%s902 + $0x40] sm:$0xff]
        %v912 = vld [vmem:[%s902 + $0x48] sm:$0xff]
        %v913 = vld [vmem:[%s902 + $0x50] sm:$0xff]
        %v914 = vld [vmem:[%s902 + $0x58] sm:$0xff]
        %v915 = vld [vmem:[%s902 + $0x60] sm:$0xff]
        %v916 = vld [vmem:[%s902 + $0x68] sm:$0xff]
        %v917 = vld [vmem:[%s902 + $0x70] sm:$0xff]
        %v918 = vld [vmem:[%s902 + $0x78] sm:$0xff]
        %v935 = vunpack.c.l.b16 %v903
        %v936 = vunpack.c.h.b16 %v903
        %v937 = vunpack.c.l.b16 %v904
        %v938 = vunpack.c.h.b16 %v904
        %v939 = vunpack.c.l.b16 %v905
        %v940 = vunpack.c.h.b16 %v905
        %v941 = vunpack.c.l.b16 %v906
        %v942 = vunpack.c.h.b16 %v906
        %v943 = vunpack.c.l.b16 %v907
        %v944 = vunpack.c.h.b16 %v907
        %v945 = vunpack.c.l.b16 %v908
        %v946 = vunpack.c.h.b16 %v908
        %v947 = vunpack.c.l.b16 %v909
        %v948 = vunpack.c.h.b16 %v909
        %v949 = vunpack.c.l.b16 %v910
        %v950 = vunpack.c.h.b16 %v910
        %v951 = vunpack.c.l.b16 %v911
        %v952 = vunpack.c.h.b16 %v911
        %v953 = vunpack.c.l.b16 %v912
        %v954 = vunpack.c.h.b16 %v912
        %v955 = vunpack.c.l.b16 %v913
        %v956 = vunpack.c.h.b16 %v913
        %v957 = vunpack.c.l.b16 %v914
        %v958 = vunpack.c.h.b16 %v914
        %v959 = vunpack.c.l.b16 %v915
        %v960 = vunpack.c.h.b16 %v915
        %v961 = vunpack.c.l.b16 %v916
        %v962 = vunpack.c.h.b16 %v916
        %v963 = vunpack.c.l.b16 %v917
        %v964 = vunpack.c.h.b16 %v917
        %v965 = vunpack.c.l.b16 %v918
        %v966 = vunpack.c.h.b16 %v918
        %v967 = vpack.c.b16 %v937, %v935
        %v968 = vpack.c.b16 %v938, %v936
        %v969 = vpack.c.b16 %v941, %v939
        %v970 = vpack.c.b16 %v942, %v940
        %v971 = vpack.c.b16 %v945, %v943
        %v972 = vpack.c.b16 %v946, %v944
        %v973 = vpack.c.b16 %v949, %v947
        %v974 = vpack.c.b16 %v950, %v948
        %v975 = vpack.c.b16 %v953, %v951
        %v976 = vpack.c.b16 %v954, %v952
        %v977 = vpack.c.b16 %v957, %v955
        %v978 = vpack.c.b16 %v958, %v956
        %v979 = vpack.c.b16 %v961, %v959
        %v980 = vpack.c.b16 %v962, %v960
        %v981 = vpack.c.b16 %v965, %v963
        %v982 = vpack.c.b16 %v966, %v964
        %999 = vmatprep.subr.bf16.mxu0 %v982
        %1000 = vmatpush1.bf16.msra.mxu0 %v981
        %1001 = vmatprep.subr.bf16.mxu0 %v980
        %1002 = vmatpush1.bf16.msra.mxu0 %v979
        %1003 = vmatprep.subr.bf16.mxu0 %v978
        %1004 = vmatpush1.bf16.msra.mxu0 %v977
        %1005 = vmatprep.subr.bf16.mxu0 %v976
        %1006 = vmatpush1.bf16.msra.mxu0 %v975
        %1007 = vmatprep.subr.bf16.mxu0 %v974
        %1008 = vmatpush1.bf16.msra.mxu0 %v973
        %1009 = vmatprep.subr.bf16.mxu0 %v972
        %1010 = vmatpush1.bf16.msra.mxu0 %v971
        %1011 = vmatprep.subr.bf16.mxu0 %v970
        %1012 = vmatpush1.bf16.msra.mxu0 %v969
        %1013 = vmatprep.subr.bf16.mxu0 %v968
        %1014 = vmatpush1.bf16.msra.mxu0 %v967
        %1015 = vmatprep.subr.bf16.mxu0 0
        %1016 = vmatpush2.bf16.msra.mxu0 0
        %1017 = vmatprep.subr.bf16.mxu0 0
        %1018 = vmatpush2.bf16.msra.mxu0 0
        %1019 = vmatprep.subr.bf16.mxu0 0
        %1020 = vmatpush2.bf16.msra.mxu0 0
        %1021 = vmatprep.subr.bf16.mxu0 0
        %1022 = vmatpush2.bf16.msra.mxu0 0
        %1023 = vmatprep.subr.bf16.mxu0 0
        %1024 = vmatpush2.bf16.msra.mxu0 0
        %1025 = vmatprep.subr.bf16.mxu0 0
        %1026 = vmatpush2.bf16.msra.mxu0 0
        %1027 = vmatprep.subr.bf16.mxu0 0
        %1028 = vmatpush2.bf16.msra.mxu0 0
        %1029 = vmatprep.subr.bf16.mxu0 0
        %1030 = vmatpush2.bf16.msra.mxu0 0
        %1031 = vmatprep.mubr.bf16.mxu0 0
        %1032 = vmatmul.mubr.bf16.gmra.mxu0 %v621
        %v1033 = vpop.f32.mrf.mxu0
        %v1034 = vadd.f32 0.0, %v1033
        %v1035 = vpop.f32.mrf.mxu0
        %v1036 = vadd.f32 0.0, %v1035
        %v1037 = vpop.f32.mrf.mxu0
        %v1038 = vadd.f32 0.0, %v1037
        %v1039 = vpop.f32.mrf.mxu0
        %v1040 = vadd.f32 0.0, %v1039
        %1041 = vdwg.mxu0
        %v1042 = vadd.f32 %v894, %v1034
        %v1043 = vadd.f32 %v896, %v1036
        %v1044 = vadd.f32 %v898, %v1038
        %v1045 = vadd.f32 %v900, %v1040
        %v1046 = vld [vmem:[#allocation10] sm:$0xff]
        %v1047 = vld [vmem:[#allocation10 + $0x8] sm:$0xff]
        %v1048 = vld [vmem:[#allocation10 + $0x10] sm:$0xff]
        %v1049 = vld [vmem:[#allocation10 + $0x18] sm:$0xff]
        %v1050 = vld [vmem:[#allocation10 + $0x20] sm:$0xff]
        %v1051 = vld [vmem:[#allocation10 + $0x28] sm:$0xff]
        %v1052 = vld [vmem:[#allocation10 + $0x30] sm:$0xff]
        %v1053 = vld [vmem:[#allocation10 + $0x38] sm:$0xff]
        %v1054 = vld [vmem:[#allocation10 + $0x40] sm:$0xff]
        %v1055 = vld [vmem:[#allocation10 + $0x48] sm:$0xff]
        %v1056 = vld [vmem:[#allocation10 + $0x50] sm:$0xff]
        %v1057 = vld [vmem:[#allocation10 + $0x58] sm:$0xff]
        %v1058 = vld [vmem:[#allocation10 + $0x60] sm:$0xff]
        %v1059 = vld [vmem:[#allocation10 + $0x68] sm:$0xff]
        %v1060 = vld [vmem:[#allocation10 + $0x70] sm:$0xff]
        %v1061 = vld [vmem:[#allocation10 + $0x78] sm:$0xff]
        %s1062 = scalar_lea.vmem [#allocation10], 128
        %v1063 = vld [vmem:[%s1062] sm:$0xff]
        %v1064 = vld [vmem:[%s1062 + $0x8] sm:$0xff]
        %v1065 = vld [vmem:[%s1062 + $0x10] sm:$0xff]
        %v1066 = vld [vmem:[%s1062 + $0x18] sm:$0xff]
        %v1067 = vld [vmem:[%s1062 + $0x20] sm:$0xff]
        %v1068 = vld [vmem:[%s1062 + $0x28] sm:$0xff]
        %v1069 = vld [vmem:[%s1062 + $0x30] sm:$0xff]
        %v1070 = vld [vmem:[%s1062 + $0x38] sm:$0xff]
        %v1071 = vld [vmem:[%s1062 + $0x40] sm:$0xff]
        %v1072 = vld [vmem:[%s1062 + $0x48] sm:$0xff]
        %v1073 = vld [vmem:[%s1062 + $0x50] sm:$0xff]
        %v1074 = vld [vmem:[%s1062 + $0x58] sm:$0xff]
        %v1075 = vld [vmem:[%s1062 + $0x60] sm:$0xff]
        %v1076 = vld [vmem:[%s1062 + $0x68] sm:$0xff]
        %v1077 = vld [vmem:[%s1062 + $0x70] sm:$0xff]
        %v1078 = vld [vmem:[%s1062 + $0x78] sm:$0xff]
        %v1095 = vunpack.c.l.b16 %v1063
        %v1096 = vunpack.c.h.b16 %v1063
        %v1097 = vunpack.c.l.b16 %v1064
        %v1098 = vunpack.c.h.b16 %v1064
        %v1099 = vunpack.c.l.b16 %v1065
        %v1100 = vunpack.c.h.b16 %v1065
        %v1101 = vunpack.c.l.b16 %v1066
        %v1102 = vunpack.c.h.b16 %v1066
        %v1103 = vunpack.c.l.b16 %v1067
        %v1104 = vunpack.c.h.b16 %v1067
        %v1105 = vunpack.c.l.b16 %v1068
        %v1106 = vunpack.c.h.b16 %v1068
        %v1107 = vunpack.c.l.b16 %v1069
        %v1108 = vunpack.c.h.b16 %v1069
        %v1109 = vunpack.c.l.b16 %v1070
        %v1110 = vunpack.c.h.b16 %v1070
        %v1111 = vunpack.c.l.b16 %v1071
        %v1112 = vunpack.c.h.b16 %v1071
        %v1113 = vunpack.c.l.b16 %v1072
        %v1114 = vunpack.c.h.b16 %v1072
        %v1115 = vunpack.c.l.b16 %v1073
        %v1116 = vunpack.c.h.b16 %v1073
        %v1117 = vunpack.c.l.b16 %v1074
        %v1118 = vunpack.c.h.b16 %v1074
        %v1119 = vunpack.c.l.b16 %v1075
        %v1120 = vunpack.c.h.b16 %v1075
        %v1121 = vunpack.c.l.b16 %v1076
        %v1122 = vunpack.c.h.b16 %v1076
        %v1123 = vunpack.c.l.b16 %v1077
        %v1124 = vunpack.c.h.b16 %v1077
        %v1125 = vunpack.c.l.b16 %v1078
        %v1126 = vunpack.c.h.b16 %v1078
        %v1127 = vpack.c.b16 %v1097, %v1095
        %v1128 = vpack.c.b16 %v1098, %v1096
        %v1129 = vpack.c.b16 %v1101, %v1099
        %v1130 = vpack.c.b16 %v1102, %v1100
        %v1131 = vpack.c.b16 %v1105, %v1103
        %v1132 = vpack.c.b16 %v1106, %v1104
        %v1133 = vpack.c.b16 %v1109, %v1107
        %v1134 = vpack.c.b16 %v1110, %v1108
        %v1135 = vpack.c.b16 %v1113, %v1111
        %v1136 = vpack.c.b16 %v1114, %v1112
        %v1137 = vpack.c.b16 %v1117, %v1115
        %v1138 = vpack.c.b16 %v1118, %v1116
        %v1139 = vpack.c.b16 %v1121, %v1119
        %v1140 = vpack.c.b16 %v1122, %v1120
        %v1141 = vpack.c.b16 %v1125, %v1123
        %v1142 = vpack.c.b16 %v1126, %v1124
        %1159 = vmatprep.subr.bf16.mxu0 %v1142
        %1160 = vmatpush1.bf16.msra.mxu0 %v1141
        %1161 = vmatprep.subr.bf16.mxu0 %v1140
        %1162 = vmatpush1.bf16.msra.mxu0 %v1139
        %1163 = vmatprep.subr.bf16.mxu0 %v1138
        %1164 = vmatpush1.bf16.msra.mxu0 %v1137
        %1165 = vmatprep.subr.bf16.mxu0 %v1136
        %1166 = vmatpush1.bf16.msra.mxu0 %v1135
        %1167 = vmatprep.subr.bf16.mxu0 %v1134
        %1168 = vmatpush1.bf16.msra.mxu0 %v1133
        %1169 = vmatprep.subr.bf16.mxu0 %v1132
        %1170 = vmatpush1.bf16.msra.mxu0 %v1131
        %1171 = vmatprep.subr.bf16.mxu0 %v1130
        %1172 = vmatpush1.bf16.msra.mxu0 %v1129
        %1173 = vmatprep.subr.bf16.mxu0 %v1128
        %1174 = vmatpush1.bf16.msra.mxu0 %v1127
        %1175 = vmatprep.subr.bf16.mxu0 0
        %1176 = vmatpush2.bf16.msra.mxu0 0
        %1177 = vmatprep.subr.bf16.mxu0 0
        %1178 = vmatpush2.bf16.msra.mxu0 0
        %1179 = vmatprep.subr.bf16.mxu0 0
        %1180 = vmatpush2.bf16.msra.mxu0 0
        %1181 = vmatprep.subr.bf16.mxu0 0
        %1182 = vmatpush2.bf16.msra.mxu0 0
        %1183 = vmatprep.subr.bf16.mxu0 0
        %1184 = vmatpush2.bf16.msra.mxu0 0
        %1185 = vmatprep.subr.bf16.mxu0 0
        %1186 = vmatpush2.bf16.msra.mxu0 0
        %1187 = vmatprep.subr.bf16.mxu0 0
        %1188 = vmatpush2.bf16.msra.mxu0 0
        %1189 = vmatprep.subr.bf16.mxu0 0
        %1190 = vmatpush2.bf16.msra.mxu0 0
        %1191 = vmatprep.mubr.bf16.mxu0 0
        %1192 = vmatmul.mubr.bf16.gmra.mxu0 %v620
        %v1193 = vpop.f32.mrf.mxu0
        %v1194 = vadd.f32 0.0, %v1193
        %v1195 = vpop.f32.mrf.mxu0
        %v1196 = vadd.f32 0.0, %v1195
        %v1197 = vpop.f32.mrf.mxu0
        %v1198 = vadd.f32 0.0, %v1197
        %v1199 = vpop.f32.mrf.mxu0
        %v1200 = vadd.f32 0.0, %v1199
        %1201 = vdwg.mxu0
        %v1218 = vunpack.c.l.b16 %v1046
        %v1219 = vunpack.c.h.b16 %v1046
        %v1220 = vunpack.c.l.b16 %v1047
        %v1221 = vunpack.c.h.b16 %v1047
        %v1222 = vunpack.c.l.b16 %v1048
        %v1223 = vunpack.c.h.b16 %v1048
        %v1224 = vunpack.c.l.b16 %v1049
        %v1225 = vunpack.c.h.b16 %v1049
        %v1226 = vunpack.c.l.b16 %v1050
        %v1227 = vunpack.c.h.b16 %v1050
        %v1228 = vunpack.c.l.b16 %v1051
        %v1229 = vunpack.c.h.b16 %v1051
        %v1230 = vunpack.c.l.b16 %v1052
        %v1231 = vunpack.c.h.b16 %v1052
        %v1232 = vunpack.c.l.b16 %v1053
        %v1233 = vunpack.c.h.b16 %v1053
        %v1234 = vunpack.c.l.b16 %v1054
        %v1235 = vunpack.c.h.b16 %v1054
        %v1236 = vunpack.c.l.b16 %v1055
        %v1237 = vunpack.c.h.b16 %v1055
        %v1238 = vunpack.c.l.b16 %v1056
        %v1239 = vunpack.c.h.b16 %v1056
        %v1240 = vunpack.c.l.b16 %v1057
        %v1241 = vunpack.c.h.b16 %v1057
        %v1242 = vunpack.c.l.b16 %v1058
        %v1243 = vunpack.c.h.b16 %v1058
        %v1244 = vunpack.c.l.b16 %v1059
        %v1245 = vunpack.c.h.b16 %v1059
        %v1246 = vunpack.c.l.b16 %v1060
        %v1247 = vunpack.c.h.b16 %v1060
        %v1248 = vunpack.c.l.b16 %v1061
        %v1249 = vunpack.c.h.b16 %v1061
        %v1250 = vpack.c.b16 %v1220, %v1218
        %v1251 = vpack.c.b16 %v1221, %v1219
        %v1252 = vpack.c.b16 %v1224, %v1222
        %v1253 = vpack.c.b16 %v1225, %v1223
        %v1254 = vpack.c.b16 %v1228, %v1226
        %v1255 = vpack.c.b16 %v1229, %v1227
        %v1256 = vpack.c.b16 %v1232, %v1230
        %v1257 = vpack.c.b16 %v1233, %v1231
        %v1258 = vpack.c.b16 %v1236, %v1234
        %v1259 = vpack.c.b16 %v1237, %v1235
        %v1260 = vpack.c.b16 %v1240, %v1238
        %v1261 = vpack.c.b16 %v1241, %v1239
        %v1262 = vpack.c.b16 %v1244, %v1242
        %v1263 = vpack.c.b16 %v1245, %v1243
        %v1264 = vpack.c.b16 %v1248, %v1246
        %v1265 = vpack.c.b16 %v1249, %v1247
        %1282 = vmatprep.subr.bf16.mxu0 %v1265
        %1283 = vmatpush1.bf16.msra.mxu0 %v1264
        %1284 = vmatprep.subr.bf16.mxu0 %v1263
        %1285 = vmatpush1.bf16.msra.mxu0 %v1262
        %1286 = vmatprep.subr.bf16.mxu0 %v1261
        %1287 = vmatpush1.bf16.msra.mxu0 %v1260
        %1288 = vmatprep.subr.bf16.mxu0 %v1259
        %1289 = vmatpush1.bf16.msra.mxu0 %v1258
        %1290 = vmatprep.subr.bf16.mxu0 %v1257
        %1291 = vmatpush1.bf16.msra.mxu0 %v1256
        %1292 = vmatprep.subr.bf16.mxu0 %v1255
        %1293 = vmatpush1.bf16.msra.mxu0 %v1254
        %1294 = vmatprep.subr.bf16.mxu0 %v1253
        %1295 = vmatpush1.bf16.msra.mxu0 %v1252
        %1296 = vmatprep.subr.bf16.mxu0 %v1251
        %1297 = vmatpush1.bf16.msra.mxu0 %v1250
        %1298 = vmatprep.subr.bf16.mxu0 0
        %1299 = vmatpush2.bf16.msra.mxu0 0
        %1300 = vmatprep.subr.bf16.mxu0 0
        %1301 = vmatpush2.bf16.msra.mxu0 0
        %1302 = vmatprep.subr.bf16.mxu0 0
        %1303 = vmatpush2.bf16.msra.mxu0 0
        %1304 = vmatprep.subr.bf16.mxu0 0
        %1305 = vmatpush2.bf16.msra.mxu0 0
        %1306 = vmatprep.subr.bf16.mxu0 0
        %1307 = vmatpush2.bf16.msra.mxu0 0
        %1308 = vmatprep.subr.bf16.mxu0 0
        %1309 = vmatpush2.bf16.msra.mxu0 0
        %1310 = vmatprep.subr.bf16.mxu0 0
        %1311 = vmatpush2.bf16.msra.mxu0 0
        %1312 = vmatprep.subr.bf16.mxu0 0
        %1313 = vmatpush2.bf16.msra.mxu0 0
        %1314 = vmatprep.mubr.bf16.mxu0 0
        %1315 = vmatmul.mubr.bf16.gmra.mxu0 %v618
        %v1316 = vpop.f32.mrf.mxu0
        %v1317 = vadd.f32 %v1194, %v1316
        %v1318 = vpop.f32.mrf.mxu0
        %v1319 = vadd.f32 %v1196, %v1318
        %v1320 = vpop.f32.mrf.mxu0
        %v1321 = vadd.f32 %v1198, %v1320
        %v1322 = vpop.f32.mrf.mxu0
        %v1323 = vadd.f32 %v1200, %v1322
        %1324 = vdwg.mxu0
        %s1325 = scalar_lea.vmem [#allocation10], 256
        %v1326 = vld [vmem:[%s1325] sm:$0xff]
        %v1327 = vld [vmem:[%s1325 + $0x8] sm:$0xff]
        %v1328 = vld [vmem:[%s1325 + $0x10] sm:$0xff]
        %v1329 = vld [vmem:[%s1325 + $0x18] sm:$0xff]
        %v1330 = vld [vmem:[%s1325 + $0x20] sm:$0xff]
        %v1331 = vld [vmem:[%s1325 + $0x28] sm:$0xff]
        %v1332 = vld [vmem:[%s1325 + $0x30] sm:$0xff]
        %v1333 = vld [vmem:[%s1325 + $0x38] sm:$0xff]
        %v1334 = vld [vmem:[%s1325 + $0x40] sm:$0xff]
        %v1335 = vld [vmem:[%s1325 + $0x48] sm:$0xff]
        %v1336 = vld [vmem:[%s1325 + $0x50] sm:$0xff]
        %v1337 = vld [vmem:[%s1325 + $0x58] sm:$0xff]
        %v1338 = vld [vmem:[%s1325 + $0x60] sm:$0xff]
        %v1339 = vld [vmem:[%s1325 + $0x68] sm:$0xff]
        %v1340 = vld [vmem:[%s1325 + $0x70] sm:$0xff]
        %v1341 = vld [vmem:[%s1325 + $0x78] sm:$0xff]
        %v1358 = vunpack.c.l.b16 %v1326
        %v1359 = vunpack.c.h.b16 %v1326
        %v1360 = vunpack.c.l.b16 %v1327
        %v1361 = vunpack.c.h.b16 %v1327
        %v1362 = vunpack.c.l.b16 %v1328
        %v1363 = vunpack.c.h.b16 %v1328
        %v1364 = vunpack.c.l.b16 %v1329
        %v1365 = vunpack.c.h.b16 %v1329
        %v1366 = vunpack.c.l.b16 %v1330
        %v1367 = vunpack.c.h.b16 %v1330
        %v1368 = vunpack.c.l.b16 %v1331
        %v1369 = vunpack.c.h.b16 %v1331
        %v1370 = vunpack.c.l.b16 %v1332
        %v1371 = vunpack.c.h.b16 %v1332
        %v1372 = vunpack.c.l.b16 %v1333
        %v1373 = vunpack.c.h.b16 %v1333
        %v1374 = vunpack.c.l.b16 %v1334
        %v1375 = vunpack.c.h.b16 %v1334
        %v1376 = vunpack.c.l.b16 %v1335
        %v1377 = vunpack.c.h.b16 %v1335
        %v1378 = vunpack.c.l.b16 %v1336
        %v1379 = vunpack.c.h.b16 %v1336
        %v1380 = vunpack.c.l.b16 %v1337
        %v1381 = vunpack.c.h.b16 %v1337
        %v1382 = vunpack.c.l.b16 %v1338
        %v1383 = vunpack.c.h.b16 %v1338
        %v1384 = vunpack.c.l.b16 %v1339
        %v1385 = vunpack.c.h.b16 %v1339
        %v1386 = vunpack.c.l.b16 %v1340
        %v1387 = vunpack.c.h.b16 %v1340
        %v1388 = vunpack.c.l.b16 %v1341
        %v1389 = vunpack.c.h.b16 %v1341
        %v1390 = vpack.c.b16 %v1360, %v1358
        %v1391 = vpack.c.b16 %v1361, %v1359
        %v1392 = vpack.c.b16 %v1364, %v1362
        %v1393 = vpack.c.b16 %v1365, %v1363
        %v1394 = vpack.c.b16 %v1368, %v1366
        %v1395 = vpack.c.b16 %v1369, %v1367
        %v1396 = vpack.c.b16 %v1372, %v1370
        %v1397 = vpack.c.b16 %v1373, %v1371
        %v1398 = vpack.c.b16 %v1376, %v1374
        %v1399 = vpack.c.b16 %v1377, %v1375
        %v1400 = vpack.c.b16 %v1380, %v1378
        %v1401 = vpack.c.b16 %v1381, %v1379
        %v1402 = vpack.c.b16 %v1384, %v1382
        %v1403 = vpack.c.b16 %v1385, %v1383
        %v1404 = vpack.c.b16 %v1388, %v1386
        %v1405 = vpack.c.b16 %v1389, %v1387
        %1422 = vmatprep.subr.bf16.mxu0 %v1405
        %1423 = vmatpush1.bf16.msra.mxu0 %v1404
        %1424 = vmatprep.subr.bf16.mxu0 %v1403
        %1425 = vmatpush1.bf16.msra.mxu0 %v1402
        %1426 = vmatprep.subr.bf16.mxu0 %v1401
        %1427 = vmatpush1.bf16.msra.mxu0 %v1400
        %1428 = vmatprep.subr.bf16.mxu0 %v1399
        %1429 = vmatpush1.bf16.msra.mxu0 %v1398
        %1430 = vmatprep.subr.bf16.mxu0 %v1397
        %1431 = vmatpush1.bf16.msra.mxu0 %v1396
        %1432 = vmatprep.subr.bf16.mxu0 %v1395
        %1433 = vmatpush1.bf16.msra.mxu0 %v1394
        %1434 = vmatprep.subr.bf16.mxu0 %v1393
        %1435 = vmatpush1.bf16.msra.mxu0 %v1392
        %1436 = vmatprep.subr.bf16.mxu0 %v1391
        %1437 = vmatpush1.bf16.msra.mxu0 %v1390
        %1438 = vmatprep.subr.bf16.mxu0 0
        %1439 = vmatpush2.bf16.msra.mxu0 0
        %1440 = vmatprep.subr.bf16.mxu0 0
        %1441 = vmatpush2.bf16.msra.mxu0 0
        %1442 = vmatprep.subr.bf16.mxu0 0
        %1443 = vmatpush2.bf16.msra.mxu0 0
        %1444 = vmatprep.subr.bf16.mxu0 0
        %1445 = vmatpush2.bf16.msra.mxu0 0
        %1446 = vmatprep.subr.bf16.mxu0 0
        %1447 = vmatpush2.bf16.msra.mxu0 0
        %1448 = vmatprep.subr.bf16.mxu0 0
        %1449 = vmatpush2.bf16.msra.mxu0 0
        %1450 = vmatprep.subr.bf16.mxu0 0
        %1451 = vmatpush2.bf16.msra.mxu0 0
        %1452 = vmatprep.subr.bf16.mxu0 0
        %1453 = vmatpush2.bf16.msra.mxu0 0
        %1454 = vmatprep.mubr.bf16.mxu0 0
        %1455 = vmatmul.mubr.bf16.gmra.mxu0 %v622
        %v1456 = vpop.f32.mrf.mxu0
        %v1457 = vadd.f32 0.0, %v1456
        %v1458 = vpop.f32.mrf.mxu0
        %v1459 = vadd.f32 0.0, %v1458
        %v1460 = vpop.f32.mrf.mxu0
        %v1461 = vadd.f32 0.0, %v1460
        %v1462 = vpop.f32.mrf.mxu0
        %v1463 = vadd.f32 0.0, %v1462
        %1464 = vdwg.mxu0
        %v1465 = vadd.f32 %v1317, %v1457
        %v1466 = vadd.f32 %v1319, %v1459
        %v1467 = vadd.f32 %v1321, %v1461
        %v1468 = vadd.f32 %v1323, %v1463
        %v1469 = vld [vmem:[%s4] sm:$0x3]
        %v1471 = vlaneseq
        %v1472 = vshrl.u32 %v1471, 7
        %v1473 = vsub.s32 0, %v1472
        %v1474 = vrot.slane %v1469, %v1473
        %v1475 = vlaneseq
        %v1476 = vshrl.u32 %v1475, 7
        %v1477 = vsub.s32 1, %v1476
        %v1478 = vrot.slane %v1469, %v1477
        %v1481 = vadd.f32 %v1042, %v1474
        %v1482 = vadd.f32 %v1043, %v1478
        %v1483 = vadd.f32 %v1044, %v1474
        %v1484 = vadd.f32 %v1045, %v1478
        %v1485 = vmax.f32 %v1481, 0.0
        %v1486 = vmax.f32 %v1482, 0.0
        %v1487 = vmax.f32 %v1483, 0.0
        %v1488 = vmax.f32 %v1484, 0.0
        %v1489 = vld [vmem:[%s6] sm:$0x3]
        %v1491 = vlaneseq
        %v1492 = vshrl.u32 %v1491, 7
        %v1493 = vsub.s32 0, %v1492
        %v1494 = vrot.slane %v1489, %v1493
        %v1495 = vlaneseq
        %v1496 = vshrl.u32 %v1495, 7
        %v1497 = vsub.s32 1, %v1496
        %v1498 = vrot.slane %v1489, %v1497
        %v1501 = vadd.f32 %v1465, %v1494
        %v1502 = vadd.f32 %v1466, %v1498
        %v1503 = vadd.f32 %v1467, %v1494
        %v1504 = vadd.f32 %v1468, %v1498
        %v1505 = vmax.f32 %v1501, 0.0
        %v1506 = vmax.f32 %v1502, 0.0
        %v1507 = vmax.f32 %v1503, 0.0
        %v1508 = vmax.f32 %v1504, 0.0
        %v1509 = vadd.f32 %v1485, %v1505
        %v1510 = vadd.f32 %v1486, %v1506
        %v1511 = vadd.f32 %v1487, %v1507
        %v1512 = vadd.f32 %v1488, %v1508
        %1513 = vst [vmem:[%s524] sm:$0xff] %v1509
        %1514 = vst [vmem:[%s524 + $0x8] sm:$0xff] %v1510
        %1515 = vst [vmem:[%s524 + $0x10] sm:$0xff] %v1511
        %1516 = vst [vmem:[%s524 + $0x18] sm:$0xff] %v1512
        %v1517 = vpack.c.bf16 %v1511, %v1509
        %v1518 = vpack.c.bf16 %v1512, %v1510
        %v1519 = vld [vmem:[#allocation11] sm:$0xf]
        %v1520 = vld [vmem:[#allocation11 + $0x4] sm:$0xf]
        %v1521 = vld [vmem:[#allocation11 + $0x8] sm:$0xf]
        %v1522 = vld [vmem:[#allocation11 + $0xc] sm:$0xf]
        %v1523 = vld [vmem:[#allocation11 + $0x10] sm:$0xf]
        %v1524 = vld [vmem:[#allocation11 + $0x14] sm:$0xf]
        %v1525 = vld [vmem:[#allocation11 + $0x18] sm:$0xf]
        %v1526 = vld [vmem:[#allocation11 + $0x1c] sm:$0xf]
        %v1527 = vld [vmem:[#allocation11 + $0x20] sm:$0xf]
        %v1528 = vld [vmem:[#allocation11 + $0x24] sm:$0xf]
        %v1529 = vld [vmem:[#allocation11 + $0x28] sm:$0xf]
        %v1530 = vld [vmem:[#allocation11 + $0x2c] sm:$0xf]
        %v1531 = vld [vmem:[#allocation11 + $0x30] sm:$0xf]
        %v1532 = vld [vmem:[#allocation11 + $0x34] sm:$0xf]
        %v1533 = vld [vmem:[#allocation11 + $0x38] sm:$0xf]
        %v1534 = vld [vmem:[#allocation11 + $0x3c] sm:$0xf]
        %v1535 = vld [vmem:[#allocation11 + $0x40] sm:$0xf]
        %v1536 = vld [vmem:[#allocation11 + $0x44] sm:$0xf]
        %v1537 = vld [vmem:[#allocation11 + $0x48] sm:$0xf]
        %v1538 = vld [vmem:[#allocation11 + $0x4c] sm:$0xf]
        %v1539 = vld [vmem:[#allocation11 + $0x50] sm:$0xf]
        %v1540 = vld [vmem:[#allocation11 + $0x54] sm:$0xf]
        %v1541 = vld [vmem:[#allocation11 + $0x58] sm:$0xf]
        %v1542 = vld [vmem:[#allocation11 + $0x5c] sm:$0xf]
        %v1543 = vld [vmem:[#allocation11 + $0x60] sm:$0xf]
        %v1544 = vld [vmem:[#allocation11 + $0x64] sm:$0xf]
        %v1545 = vld [vmem:[#allocation11 + $0x68] sm:$0xf]
        %v1546 = vld [vmem:[#allocation11 + $0x6c] sm:$0xf]
        %v1547 = vld [vmem:[#allocation11 + $0x70] sm:$0xf]
        %v1548 = vld [vmem:[#allocation11 + $0x74] sm:$0xf]
        %v1549 = vld [vmem:[#allocation11 + $0x78] sm:$0xf]
        %v1550 = vld [vmem:[#allocation11 + $0x7c] sm:$0xf]
        %v1583 = vunpack.c.l.b16 %v1519
        %v1584 = vunpack.c.l.b16 %v1520
        %v1585 = vunpack.c.l.b16 %v1521
        %v1586 = vunpack.c.l.b16 %v1522
        %v1587 = vunpack.c.l.b16 %v1523
        %v1588 = vunpack.c.l.b16 %v1524
        %v1589 = vunpack.c.l.b16 %v1525
        %v1590 = vunpack.c.l.b16 %v1526
        %v1591 = vunpack.c.l.b16 %v1527
        %v1592 = vunpack.c.l.b16 %v1528
        %v1593 = vunpack.c.l.b16 %v1529
        %v1594 = vunpack.c.l.b16 %v1530
        %v1595 = vunpack.c.l.b16 %v1531
        %v1596 = vunpack.c.l.b16 %v1532
        %v1597 = vunpack.c.l.b16 %v1533
        %v1598 = vunpack.c.l.b16 %v1534
        %v1599 = vunpack.c.l.b16 %v1535
        %v1600 = vunpack.c.l.b16 %v1536
        %v1601 = vunpack.c.l.b16 %v1537
        %v1602 = vunpack.c.l.b16 %v1538
        %v1603 = vunpack.c.l.b16 %v1539
        %v1604 = vunpack.c.l.b16 %v1540
        %v1605 = vunpack.c.l.b16 %v1541
        %v1606 = vunpack.c.l.b16 %v1542
        %v1607 = vunpack.c.l.b16 %v1543
        %v1608 = vunpack.c.l.b16 %v1544
        %v1609 = vunpack.c.l.b16 %v1545
        %v1610 = vunpack.c.l.b16 %v1546
        %v1611 = vunpack.c.l.b16 %v1547
        %v1612 = vunpack.c.l.b16 %v1548
        %v1613 = vunpack.c.l.b16 %v1549
        %v1614 = vunpack.c.l.b16 %v1550
        %v1615 = vpack.c.b16 %v1584, %v1583
        %v1616 = vpack.c.b16 %v1586, %v1585
        %v1617 = vpack.c.b16 %v1588, %v1587
        %v1618 = vpack.c.b16 %v1590, %v1589
        %v1619 = vpack.c.b16 %v1592, %v1591
        %v1620 = vpack.c.b16 %v1594, %v1593
        %v1621 = vpack.c.b16 %v1596, %v1595
        %v1622 = vpack.c.b16 %v1598, %v1597
        %v1623 = vpack.c.b16 %v1600, %v1599
        %v1624 = vpack.c.b16 %v1602, %v1601
        %v1625 = vpack.c.b16 %v1604, %v1603
        %v1626 = vpack.c.b16 %v1606, %v1605
        %v1627 = vpack.c.b16 %v1608, %v1607
        %v1628 = vpack.c.b16 %v1610, %v1609
        %v1629 = vpack.c.b16 %v1612, %v1611
        %v1630 = vpack.c.b16 %v1614, %v1613
        %1647 = vmatprep.subr.bf16.mxu0 0
        %1648 = vmatpush1.bf16.msra.mxu0 %v1622
        %1649 = vmatprep.subr.bf16.mxu0 0
        %1650 = vmatpush1.bf16.msra.mxu0 %v1621
        %1651 = vmatprep.subr.bf16.mxu0 0
        %1652 = vmatpush1.bf16.msra.mxu0 %v1620
        %1653 = vmatprep.subr.bf16.mxu0 0
        %1654 = vmatpush1.bf16.msra.mxu0 %v1619
        %1655 = vmatprep.subr.bf16.mxu0 0
        %1656 = vmatpush1.bf16.msra.mxu0 %v1618
        %1657 = vmatprep.subr.bf16.mxu0 0
        %1658 = vmatpush1.bf16.msra.mxu0 %v1617
        %1659 = vmatprep.subr.bf16.mxu0 0
        %1660 = vmatpush1.bf16.msra.mxu0 %v1616
        %1661 = vmatprep.subr.bf16.mxu0 0
        %1662 = vmatpush1.bf16.msra.mxu0 %v1615
        %1663 = vmatprep.subr.bf16.mxu0 0
        %1664 = vmatpush2.bf16.msra.mxu0 %v1630
        %1665 = vmatprep.subr.bf16.mxu0 0
        %1666 = vmatpush2.bf16.msra.mxu0 %v1629
        %1667 = vmatprep.subr.bf16.mxu0 0
        %1668 = vmatpush2.bf16.msra.mxu0 %v1628
        %1669 = vmatprep.subr.bf16.mxu0 0
        %1670 = vmatpush2.bf16.msra.mxu0 %v1627
        %1671 = vmatprep.subr.bf16.mxu0 0
        %1672 = vmatpush2.bf16.msra.mxu0 %v1626
        %1673 = vmatprep.subr.bf16.mxu0 0
        %1674 = vmatpush2.bf16.msra.mxu0 %v1625
        %1675 = vmatprep.subr.bf16.mxu0 0
        %1676 = vmatpush2.bf16.msra.mxu0 %v1624
        %1677 = vmatprep.subr.bf16.mxu0 0
        %1678 = vmatpush2.bf16.msra.mxu0 %v1623
        %1679 = vmatprep.mubr.bf16.mxu0 %v1518
        %1680 = vmatmul.mubr.bf16.gmra.mxu0 %v1517
        %v1681 = vpop.f32.mrf.mxu0
        %v1682 = vadd.f32 0.0, %v1681
        %v1683 = vpop.f32.mrf.mxu0
        %v1684 = vpop.f32.mrf.mxu0
        %v1685 = vadd.f32 0.0, %v1684
        %v1686 = vpop.f32.mrf.mxu0
        %1687 = vdwg.mxu0
        %v1688 = vmax.f32 %v1682, 0.0
        %v1689 = vmax.f32 %v1685, 0.0
        %1690 = vadd.xlane.f32.xlu0 %v1688
        %v1691 = vpop.xlane.xlu0 %1690
        %1692 = vadd.xlane.f32.xlu0 %v1689
        %v1693 = vpop.xlane.xlu0 %1692
        %v1694 = vlaneseq
        %v1695 = vand.u32 %v1694, 127
        %vm1696 = vcmp.eq.s32.totalorder %v1695, 8
        %v1697 = vsel %vm1696, %v1691, %v1688
        %v1698 = vsel %vm1696, %v1693, %v1689
        %1699 = vst [vmem:[%s531] sm:$0xff] %v1697
        %1700 = vst [vmem:[%s531 + $0x8] sm:$0xff] %v1698
        %s1701 = sand.u32 %s258, 1
        %s1702 = scalar_lea.sflag [#allocation4], %s1701
        %s1703 = sand.u32 %s258, 1
        %s1704 = smul.addr %s1703, 32
        %s1705 = scalar_lea.vmem [#allocation13], %s1704
        %s1706 = sand.u32 %s286, 1
        %s1707 = scalar_lea.sflag [#allocation15], %s1706
        %s1708 = sand.u32 %s286, 1
        %s1709 = smul.addr %s1708, 16
        %s1710 = scalar_lea.vmem [#allocation14], %s1709
        // Predicated region
        $region77: #{tpu_custom_call.1} parent=51 // pred_check
          %p1711 = pneg %p268
        $region78: #{tpu_custom_call.1} parent=51 // pred_check_branch
          %1713 = sbr.rel (%p1711) target = $region80
        $region79: #{tpu_custom_call.1} parent=51 // pred_region
          %s1714 = smul.u32 2, %s40
          %s1716 = ssub.s32 512, 512
          %1717 = vsyncadd %s1702, %s1716
          %s1718 = smul.addr %s1714, 2
          %s1719 = smul.addr %s39, 4
          %s1720 = sadd.s32 %s1718, %s1719
          %s1721 = smul.addr %s1720, 128
          %s1722 = scalar_lea.hbm %s8, %s1721
          %s1723 = sshll.u32 %s1705, 4
          %s1724 = int_to_ptr.vmem [resolvable:$true] %s1723
          %1729 = dma.vmem_to_hbm [thread:$0]  %s1724, 512, %s1722, %s1702, 256, 256, 16
        $region80: #{tpu_custom_call.1} parent=51 // pred_fallthru
          _
        // Predicated region
        $region81: #{tpu_custom_call.1} parent=51 // pred_check
          %p1730 = pneg %p296
        $region82: #{tpu_custom_call.1} parent=51 // pred_check_branch
          %1732 = sbr.rel (%p1730) target = $region84
        $region83: #{tpu_custom_call.1} parent=51 // pred_region
          %s1733 = smul.u32 2, %s40
          %s1735 = ssub.s32 256, 256
          %1736 = vsyncadd %s1707, %s1735
          %s1737 = smul.addr %s39, 2
          %s1738 = sadd.s32 %s1733, %s1737
          %s1739 = smul.addr %s1738, 128
          %s1740 = scalar_lea.hbm %s9, %s1739
          %s1741 = sshll.u32 %s1710, 4
          %s1742 = int_to_ptr.vmem [resolvable:$true] %s1741
          %1747 = dma.vmem_to_hbm [thread:$0]  %s1742, 256, %s1740, %s1707, 128, 128, 8
        $region84: #{tpu_custom_call.1} parent=51 // pred_fallthru
          _
      $region52: #{tpu_custom_call.1} parent=5 // pred_fallthru
        _
      %p1748 = scmp.le.s32.totalorder 2, %s30
      // Predicated region
      $region85: #{tpu_custom_call.1} parent=5 // pred_check
        %p1749 = pneg %p1748
      $region86: #{tpu_custom_call.1} parent=5 // pred_check_branch
        %1751 = sbr.rel (%p1749) target = $region88
      $region87: #{tpu_custom_call.1} parent=5 // pred_region
        %s1752 = ssub.s32 %s30, 2
        // Predicated region
        $region89: #{tpu_custom_call.1} parent=87 // pred_check
          %p1753 = pneg %p274
        $region90: #{tpu_custom_call.1} parent=87 // pred_check_branch
          %1755 = sbr.rel (%p1753) target = $region92
        $region91: #{tpu_custom_call.1} parent=87 // pred_region
          %s1756 = sand.u32 %s259, 1
          %s1757 = scalar_lea.sflag [#allocation4], %s1756
          %s1758 = sand.u32 %s259, 1
          %s1759 = smul.addr %s1758, 32
          %s1760 = scalar_lea.vmem [#allocation13], %s1759
          %1761 = dma.done %s1757, 512
        $region92: #{tpu_custom_call.1} parent=87 // pred_fallthru
          _
        // Predicated region
        $region93: #{tpu_custom_call.1} parent=87 // pred_check
          %p1762 = pneg %p302
        $region94: #{tpu_custom_call.1} parent=87 // pred_check_branch
          %1764 = sbr.rel (%p1762) target = $region96
        $region95: #{tpu_custom_call.1} parent=87 // pred_region
          %s1765 = sand.u32 %s287, 1
          %s1766 = scalar_lea.sflag [#allocation15], %s1765
          %s1767 = sand.u32 %s287, 1
          %s1768 = smul.addr %s1767, 16
          %s1769 = scalar_lea.vmem [#allocation14], %s1768
          %1770 = dma.done %s1766, 256
        $region96: #{tpu_custom_call.1} parent=87 // pred_fallthru
          _
      $region88: #{tpu_custom_call.1} parent=5 // pred_fallthru
        _
    $region6: #{tpu_custom_call.1} parent=1 // loop_footer
      %s34 = sadd.s32 1, %s30
    $region7: #{tpu_custom_call.1} parent=1 // loop_footer_branch
      %29 = sbr.rel target = $region3
    $region8: #{tpu_custom_call.1} parent=1 // loop_exit
      _
    %1771 = vsyncpa [#allocation3], 1
    %s1772 = scalar_lea.sflag [#allocation3], 1
    %1773 = vsyncpa %s1772, 1
    %1774 = vsyncpa [#allocation6], 1
    %s1775 = scalar_lea.sflag [#allocation6], 1
    %1776 = vsyncpa %s1775, 1
    %1777 = vsyncpa [#allocation9], 1
    %1778 = vsyncpa [#allocation12], 1
    %1779 = vsyncpa [#allocation4], 1
    %s1780 = scalar_lea.sflag [#allocation4], 1
    %1781 = vsyncpa %s1780, 1
    %1782 = vsyncpa [#allocation15], 1
    %s1783 = scalar_lea.sflag [#allocation15], 1
    %1784 = vsyncpa %s1783, 1

</llo_original>
